<compile_context>
chip_gen: v7x
topology: tpu7x:2x2x1
jax: 0.10.0
libtpu: 0.0.40
codegen_flags: <defaults>
</compile_context>

<pallas_src>
import functools

import jax
import jax.numpy as jnp
from jax import lax
from jax.experimental import pallas as pl
from jax.experimental.pallas import tpu as pltpu


NEG_INF = float("-inf")


# ---------------------------------------------------------------------------
# Pallas kernel: whole _M_BlockA forward for one batch tile.
# ---------------------------------------------------------------------------
def _block_a_kernel(x_ref,                     # (4, Wo, M, 64)  compute dtype
                    wsk_ref, bsk_ref,          # (64,128) cd, (1,128) f32
                    wc_ref, bc_ref,            # (64,32)  cd, (1,32)  f32
                    w1_ref, b1_ref,            # (96,128) cd, (1,128) f32 (cols 0:48 used)
                    w23_ref, b23_ref,          # (96,128) cd, (1,128) f32 (cols 48:128 used)
                    o_ref,                     # (Wo, M, 128)
                    *, H):
    _, Wo, M, _ = x_ref.shape

    wsk = wsk_ref[...]; bsk = bsk_ref[...]
    wc = wc_ref[...];   bc = bc_ref[...]
    w1 = w1_ref[...];   b1 = b1_ref[...]
    w23 = w23_ref[...]; b23 = b23_ref[...]
    cd = wsk.dtype

    def mm(a, w, b):                           # (..., K) @ (K, N) on MXU, f32 acc
        sh = a.shape
        r = jnp.dot(a.reshape(-1, sh[-1]), w, preferred_element_type=jnp.float32)
        return r.reshape(sh[:-1] + (w.shape[-1],)) + b

    relu = lambda t: jnp.maximum(t, 0.0)

    def shift_w(val, fill):
        """val shifted by +1 along the leading W axis (row 0 <- fill), in-register."""
        pad = jnp.full((1,) + val.shape[1:], fill, val.dtype)
        return jnp.concatenate([pad, val[:-1]], axis=0)

    # Contiguous phase slabs: a_k = x[4j + k], each (Wo, M, 64).
    a0 = x_ref[0]
    a1 = x_ref[1]
    a2 = x_ref[2]
    a3 = x_ref[3]

    # ---- skip: Conv2d(64,128,(1,1),s=(1,2)) -> ReLU -> MaxPool(1,3)s2p1 ------
    #   s[2w'] from x[4w'] (a0), s[2w'+1] from x[4w'+2] (a2); s >= 0 so a 0
    #   halo is exact for the pool.  One stacked matmul for both halves.
    s_both = relu(mm(jnp.concatenate([a0, a2], axis=0), wsk, bsk))   # (2Wo,M,128)
    s_e, s_o = s_both[:Wo], s_both[Wo:]
    sx = jnp.maximum(jnp.maximum(s_e, s_o), shift_w(s_o, 0.0))

    # ---- conv trunk: MaxPool(1,3)s2p1 -> Conv2d(64,32,(1,1)) -> ReLU ---------
    #   xm[2j]   = max(x[4j-1], x[4j],   x[4j+1])   (-inf halo for x[-1])
    #   xm[2j+1] = max(x[4j+1], x[4j+2], x[4j+3])
    a3m1 = shift_w(a3, NEG_INF)
    xm_e = jnp.maximum(jnp.maximum(a3m1, a0), a1)
    xm_o = jnp.maximum(jnp.maximum(a1, a2), a3)
    y_both = relu(mm(jnp.concatenate([xm_e, xm_o], axis=0), wc, bc))  # (2Wo,M,32) f32

    # ---- conv1: Conv2d(32,48,(3,1),'same') -> ReLU -> MaxPool(1,3)s2p1 -------
    # H taps stacked along channels (K=96), even/odd stacked along M -> one
    # matmul.  H shifts via a sublane roll on the folded (batch*H) axis with a
    # hoisted iota%H boundary mask (batch-crossing rows are masked to 0).
    hpos = lax.broadcasted_iota(jnp.int32, y_both.shape, 1) % H
    up = jnp.where(hpos == 0, 0.0, pltpu.roll(y_both, shift=1, axis=1))       # y[h-1]
    dn = jnp.where(hpos == H - 1, 0.0, pltpu.roll(y_both, shift=M - 1, axis=1))  # y[h+1]
    h96 = jnp.concatenate([up, y_both, dn], axis=-1).astype(cd)               # (2Wo,M,96)
    # w1 is zero-extended to 128 output columns -> x1 lands in channels [0,48)
    # and the rest stays exactly 0, so the final concat becomes a plain add.
    c1_both = relu(mm(h96, w1, b1))                                           # (2Wo,M,128)
    c1_e, c1_o = c1_both[:Wo], c1_both[Wo:]
    x1_ext = jnp.maximum(jnp.maximum(c1_e, c1_o), shift_w(c1_o, 0.0))         # c1 >= 0

    # ---- conv2 (ZeroPad + (1,3) s2 conv) + conv3 ((1,1) s2 conv), fused ------
    #   x2[w'] = relu(w2[0] y[2w'-1] + w2[1] y[2w'] + w2[2] y[2w'+1] + b2)
    #   x3[w'] = relu(w3 y[2w'] + b3)
    # One K=96, N=128 matmul; w23 places x2 in channels [48,96), x3 in [96,128).
    yb = y_both.astype(cd)                     # single f32->bf16 cast of y
    ye_b, yo_b = yb[:Wo], yb[Wo:]
    st2 = jnp.concatenate([shift_w(yo_b, 0.0), ye_b, yo_b], axis=-1)   # (Wo,M,96)
    x23_ext = relu(mm(st2, w23, b23))                                   # (Wo,M,128)

    # ---- concat(channel) + residual add (pure adds, lane-dense store) --------
    o_ref[...] = (x1_ext + x23_ext + sx).astype(o_ref.dtype)


# ---------------------------------------------------------------------------
# Wrapper: NCHW in / NCHW out, weight packing, grid + BlockSpecs.
# ---------------------------------------------------------------------------
@functools.partial(jax.jit,
                   static_argnames=("b_tile", "compute_dtype", "out_dtype"))
def block_a_forward(x_nchw, params, *, b_tile=4, compute_dtype=jnp.bfloat16,
                    out_dtype=jnp.float32):
    N, C, H, W = x_nchw.shape
    assert C == 64 and W % 4 == 0
    Wo = W // 4

    # largest batch tile <= b_tile that divides N
    bt = min(b_tile, N)
    while N % bt:
        bt -= 1
    M = bt * H
    assert (M % 8 == 0) or (bt == N), "batch_tile * H should be a multiple of 8"

    (wsk, bsk, wc, bc, w1, b1, w2, b2, w3, b3) = params
    cd = compute_dtype

    # ---- wrapper-side weight packing -----------------------------------
    # conv1: H taps stacked along Cin (K=96), output zero-extended to 128.
    w1e = jnp.zeros((96, 128), jnp.float32).at[:, 0:48].set(w1.reshape(96, 48))
    b1e = jnp.zeros((1, 128), jnp.float32).at[:, 0:48].set(b1)
    # conv2 taps + conv3 fused: rows = [y[2w-1] | y[2w] | y[2w+1]] blocks,
    # columns [48,96) = x2, [96,128) = x3.
    w23e = jnp.zeros((96, 128), jnp.float32)
    w23e = w23e.at[0:32, 48:96].set(w2[0])
    w23e = w23e.at[32:64, 48:96].set(w2[1])
    w23e = w23e.at[64:96, 48:96].set(w2[2])
    w23e = w23e.at[32:64, 96:128].set(w3)
    b23e = jnp.zeros((1, 128), jnp.float32).at[:, 48:96].set(b2)
    b23e = b23e.at[:, 96:128].set(b3)

    wsk_c = wsk.astype(cd)
    wc_c = wc.astype(cd)
    w1e_c = w1e.astype(cd)
    w23e_c = w23e.astype(cd)

    # layout: (N,C,H,W) -> (4, Wo, N*H, C):
    #   channels on lanes, batch*H folded on sublanes (full vreg packing),
    #   W split so the 4 stride phases are contiguous leading-dim slabs.
    x = jnp.transpose(x_nchw, (3, 0, 2, 1))          # (W, N, H, C)
    x = x.reshape(Wo, 4, N, H, C)
    x = jnp.transpose(x, (1, 0, 2, 3, 4))            # (4, Wo, N, H, C)
    x = x.reshape(4, Wo, N * H, C).astype(cd)

    def full_spec(a):
        nd = a.ndim
        return pl.BlockSpec(a.shape, lambda b, _n=nd: (0,) * _n)

    kernel = functools.partial(_block_a_kernel, H=H)

    out = pl.pallas_call(
        kernel,
        out_shape=jax.ShapeDtypeStruct((Wo, N * H, 128), out_dtype),
        grid_spec=pltpu.PrefetchScalarGridSpec(
            num_scalar_prefetch=0,
            grid=(N // bt,),
            in_specs=[
                pl.BlockSpec((4, Wo, M, 64), lambda b: (0, 0, b, 0)),
                full_spec(wsk_c), full_spec(bsk),
                full_spec(wc_c),  full_spec(bc),
                full_spec(w1e_c), full_spec(b1e),
                full_spec(w23e_c), full_spec(b23e),
            ],
            out_specs=pl.BlockSpec((Wo, M, 128), lambda b: (0, b, 0)),
        ),
        compiler_params=pltpu.CompilerParams(
            dimension_semantics=("parallel",),
            vmem_limit_bytes=64 * 1024 * 1024),
    )(x, wsk_c, bsk, wc_c, bc, w1e_c, b1e, w23e_c, b23e)

    # back to NCHW: (Wo, N*H, 128) -> (N, 128, H, Wo)
    out = out.reshape(Wo, N, H, 128)
    return jnp.transpose(out, (1, 3, 2, 0))


# ---------------------------------------------------------------------------
# Deterministic synthetic parameters (shapes dictated by the module __init__).
# Stored channels-last: weight[..., cin, cout], bias (1, cout).
# ---------------------------------------------------------------------------
def init_params(key):
    ks = jax.random.split(key, 10)
    sc = 0.1
    wsk = sc * jax.random.normal(ks[0], (64, 128), jnp.float32)   # skip 1x1
    bsk = sc * jax.random.normal(ks[1], (1, 128), jnp.float32)
    wc = sc * jax.random.normal(ks[2], (64, 32), jnp.float32)     # conv 1x1
    bc = sc * jax.random.normal(ks[3], (1, 32), jnp.float32)
    w1 = sc * jax.random.normal(ks[4], (3, 32, 48), jnp.float32)  # (3,1) conv, taps over H
    b1 = sc * jax.random.normal(ks[5], (1, 48), jnp.float32)
    w2 = sc * jax.random.normal(ks[6], (3, 32, 48), jnp.float32)  # (1,3) conv, taps over W
    b2 = sc * jax.random.normal(ks[7], (1, 48), jnp.float32)
    w3 = sc * jax.random.normal(ks[8], (32, 32), jnp.float32)     # 1x1 stride 2
    b3 = sc * jax.random.normal(ks[9], (1, 32), jnp.float32)
    return (wsk, bsk, wc, bc, w1, b1, w2, b2, w3, b3)


# ---------------------------------------------------------------------------
# Pure-JAX reference (lax.conv / reduce_window, NCHW) mirroring the kernel's
# bf16 matmul inputs + f32 accumulation, for a tight numerical check.
# ---------------------------------------------------------------------------
def reference(x, params, compute_dtype=jnp.bfloat16):
    (wsk, bsk, wc, bc, w1, b1, w2, b2, w3, b3) = params
    dn = ("NCHW", "OIHW", "NCHW")
    cd = compute_dtype

    def conv(inp, w_oihw, b, stride, padding):
        out = lax.conv_general_dilated(
            inp.astype(cd), w_oihw.astype(cd), stride, padding,
            dimension_numbers=dn, preferred_element_type=jnp.float32)
        return out + b.reshape(1, -1, 1, 1)

    def maxpool(inp):  # MaxPool2d k=(1,3) s=(1,2) p=(0,1), -inf padding
        return lax.reduce_window(
            inp, -jnp.inf, lax.max, (1, 1, 1, 3), (1, 1, 1, 2),
            [(0, 0), (0, 0), (0, 0), (1, 1)])

    relu = lambda t: jnp.maximum(t, 0.0)

    wsk_o = wsk.T[:, :, None, None]                       # (128,64,1,1)
    wc_o = wc.T[:, :, None, None]                         # (32,64,1,1)
    w1_o = jnp.transpose(w1, (2, 1, 0))[:, :, :, None]    # (48,32,3,1)
    w2_o = jnp.transpose(w2, (2, 1, 0))[:, :, None, :]    # (48,32,1,3)
    w3_o = w3.T[:, :, None, None]                         # (32,32,1,1)

    x_c = x.astype(cd).astype(jnp.float32)                # mirror input cast
    sx = maxpool(relu(conv(x_c, wsk_o, bsk, (1, 2), "VALID")))
    y = relu(conv(maxpool(x_c), wc_o, bc, (1, 1), "SAME"))
    y_c = y.astype(cd).astype(jnp.float32)                # mirror bf16 y feed
    x1 = maxpool(relu(conv(y_c, w1_o, b1, (1, 1), "SAME")))
    x2 = relu(conv(jnp.pad(y_c, ((0, 0), (0, 0), (0, 0), (1, 1))),
                   w2_o, b2, (1, 2), "VALID"))
    x3 = relu(conv(y_c, w3_o, b3, (1, 2), "VALID"))
    return jnp.concatenate([x1, x2, x3], axis=1) + sx


if __name__ == "__main__":
    key = jax.random.PRNGKey(0)
    k_x, k_p = jax.random.split(key)

    N, C, H, W = 8, 64, 8, 16
    x = jax.random.normal(k_x, (N, C, H, W), jnp.float32)
    params = init_params(k_p)

    out = block_a_forward(x, params)          # b_tile=4 -> grid of 2 batch tiles
    jax.block_until_ready(out)
    assert out.shape == (N, 128, H, W // 4), out.shape

    ref = reference(x, params)
    err = float(jnp.max(jnp.abs(out - ref)))
    if err > 1e-2:
        raise AssertionError(f"Pallas kernel mismatch vs reference: max abs err {err}")

    print("KERNEL_OK")
</pallas_src>

<mosaic_0001>
module attributes {stable_mosaic.version = 11 : i64} {
  func.func @_block_a_kernel(%arg0: i32, %arg1: memref<4x4x32x64xbf16, #tpu.memory_space<vmem>>, %arg2: memref<64x128xbf16, #tpu.memory_space<vmem>>, %arg3: memref<1x128xf32, #tpu.memory_space<vmem>>, %arg4: memref<64x32xbf16, #tpu.memory_space<vmem>>, %arg5: memref<1x32xf32, #tpu.memory_space<vmem>>, %arg6: memref<96x128xbf16, #tpu.memory_space<vmem>>, %arg7: memref<1x128xf32, #tpu.memory_space<vmem>>, %arg8: memref<96x128xbf16, #tpu.memory_space<vmem>>, %arg9: memref<1x128xf32, #tpu.memory_space<vmem>>, %arg10: memref<4x32x128xf32, #tpu.memory_space<vmem>>) attributes {dimension_semantics = [#tpu.dimension_semantics<parallel>], iteration_bounds = array<i64: 2>, scalar_prefetch = 0 : i64, scratch_operands = 0 : i64, tpu.core_type = #tpu.core_type<tc>, window_params = [{transform_indices = @transform_0, window_bounds = array<i64: 4, 4, 32, 64>}, {pipeline_mode = #tpu.pipeline_mode<synchronous>, transform_indices = @transform_1, window_bounds = array<i64: 64, 128>}, {pipeline_mode = #tpu.pipeline_mode<synchronous>, transform_indices = @transform_2, window_bounds = array<i64: 1, 128>}, {pipeline_mode = #tpu.pipeline_mode<synchronous>, transform_indices = @transform_3, window_bounds = array<i64: 64, 32>}, {pipeline_mode = #tpu.pipeline_mode<synchronous>, transform_indices = @transform_4, window_bounds = array<i64: 1, 32>}, {pipeline_mode = #tpu.pipeline_mode<synchronous>, transform_indices = @transform_5, window_bounds = array<i64: 96, 128>}, {pipeline_mode = #tpu.pipeline_mode<synchronous>, transform_indices = @transform_6, window_bounds = array<i64: 1, 128>}, {pipeline_mode = #tpu.pipeline_mode<synchronous>, transform_indices = @transform_7, window_bounds = array<i64: 96, 128>}, {pipeline_mode = #tpu.pipeline_mode<synchronous>, transform_indices = @transform_8, window_bounds = array<i64: 1, 128>}, {transform_indices = @transform_9, window_bounds = array<i64: 4, 32, 128>}]} {
    %c0 = arith.constant 0 : index
    %c0_0 = arith.constant 0 : index
    %0 = vector.load %arg2[%c0, %c0_0] : memref<64x128xbf16, #tpu.memory_space<vmem>>, vector<64x128xbf16>
    %c0_1 = arith.constant 0 : index
    %c0_2 = arith.constant 0 : index
    %1 = vector.load %arg3[%c0_1, %c0_2] : memref<1x128xf32, #tpu.memory_space<vmem>>, vector<1x128xf32>
    %c0_3 = arith.constant 0 : index
    %c0_4 = arith.constant 0 : index
    %2 = vector.load %arg4[%c0_3, %c0_4] : memref<64x32xbf16, #tpu.memory_space<vmem>>, vector<64x32xbf16>
    %c0_5 = arith.constant 0 : index
    %c0_6 = arith.constant 0 : index
    %3 = vector.load %arg5[%c0_5, %c0_6] : memref<1x32xf32, #tpu.memory_space<vmem>>, vector<1x32xf32>
    %c0_7 = arith.constant 0 : index
    %c0_8 = arith.constant 0 : index
    %4 = vector.load %arg6[%c0_7, %c0_8] : memref<96x128xbf16, #tpu.memory_space<vmem>>, vector<96x128xbf16>
    %c0_9 = arith.constant 0 : index
    %c0_10 = arith.constant 0 : index
    %5 = vector.load %arg7[%c0_9, %c0_10] : memref<1x128xf32, #tpu.memory_space<vmem>>, vector<1x128xf32>
    %c0_11 = arith.constant 0 : index
    %c0_12 = arith.constant 0 : index
    %6 = vector.load %arg8[%c0_11, %c0_12] : memref<96x128xbf16, #tpu.memory_space<vmem>>, vector<96x128xbf16>
    %c0_13 = arith.constant 0 : index
    %c0_14 = arith.constant 0 : index
    %7 = vector.load %arg9[%c0_13, %c0_14] : memref<1x128xf32, #tpu.memory_space<vmem>>, vector<1x128xf32>
    %c0_15 = arith.constant 0 : index
    %c0_16 = arith.constant 0 : index
    %c0_17 = arith.constant 0 : index
    %c0_18 = arith.constant 0 : index
    %8 = vector.load %arg1[%c0_15, %c0_16, %c0_17, %c0_18] : memref<4x4x32x64xbf16, #tpu.memory_space<vmem>>, vector<1x4x32x64xbf16>
    %9 = vector.shape_cast %8 : vector<1x4x32x64xbf16> to vector<4x32x64xbf16>
    %c1 = arith.constant 1 : index
    %c0_19 = arith.constant 0 : index
    %c0_20 = arith.constant 0 : index
    %c0_21 = arith.constant 0 : index
    %10 = vector.load %arg1[%c1, %c0_19, %c0_20, %c0_21] : memref<4x4x32x64xbf16, #tpu.memory_space<vmem>>, vector<1x4x32x64xbf16>
    %11 = vector.shape_cast %10 : vector<1x4x32x64xbf16> to vector<4x32x64xbf16>
    %c2 = arith.constant 2 : index
    %c0_22 = arith.constant 0 : index
    %c0_23 = arith.constant 0 : index
    %c0_24 = arith.constant 0 : index
    %12 = vector.load %arg1[%c2, %c0_22, %c0_23, %c0_24] : memref<4x4x32x64xbf16, #tpu.memory_space<vmem>>, vector<1x4x32x64xbf16>
    %13 = vector.shape_cast %12 : vector<1x4x32x64xbf16> to vector<4x32x64xbf16>
    %c3 = arith.constant 3 : index
    %c0_25 = arith.constant 0 : index
    %c0_26 = arith.constant 0 : index
    %c0_27 = arith.constant 0 : index
    %14 = vector.load %arg1[%c3, %c0_25, %c0_26, %c0_27] : memref<4x4x32x64xbf16, #tpu.memory_space<vmem>>, vector<1x4x32x64xbf16>
    %15 = vector.shape_cast %14 : vector<1x4x32x64xbf16> to vector<4x32x64xbf16>
    %16 = tpu.concatenate %9, %13 in 0 : vector<4x32x64xbf16>, vector<4x32x64xbf16> -> vector<8x32x64xbf16>
    %17 = vector.shape_cast %16 : vector<8x32x64xbf16> to vector<256x64xbf16>
    %cst = arith.constant dense<0.000000e+00> : vector<256x128xf32>
    %18 = tpu.matmul %17, %0, %cst {dimension_numbers = #tpu.dot_dimension_numbers<[1], [0], [0], [1], [0, 0, 1, 1], [], []>} : vector<256x64xbf16>, vector<64x128xbf16>, vector<256x128xf32> -> vector<256x128xf32>
    %19 = vector.shape_cast %18 : vector<256x128xf32> to vector<8x32x128xf32>
    %20 = vector.shape_cast %1 : vector<1x128xf32> to vector<1x1x128xf32>
    %21 = vector.broadcast %20 : vector<1x1x128xf32> to vector<8x32x128xf32>
    %22 = arith.addf %19, %21 : vector<8x32x128xf32>
    %cst_28 = arith.constant 0.000000e+00 : f32
    %23 = vector.broadcast %cst_28 : f32 to vector<8x32x128xf32>
    %24 = arith.maximumf %22, %23 : vector<8x32x128xf32>
    %25 = vector.extract_strided_slice %24 {offsets = [0, 0, 0], sizes = [4, 32, 128], strides = [1, 1, 1]} : vector<8x32x128xf32> to vector<4x32x128xf32>
    %26 = vector.extract_strided_slice %24 {offsets = [4, 0, 0], sizes = [4, 32, 128], strides = [1, 1, 1]} : vector<8x32x128xf32> to vector<4x32x128xf32>
    %27 = arith.maximumf %25, %26 : vector<4x32x128xf32>
    %cst_29 = arith.constant 0.000000e+00 : f32
    %28 = vector.broadcast %cst_29 : f32 to vector<1x32x128xf32>
    %29 = vector.extract_strided_slice %26 {offsets = [0, 0, 0], sizes = [3, 32, 128], strides = [1, 1, 1]} : vector<4x32x128xf32> to vector<3x32x128xf32>
    %30 = tpu.concatenate %28, %29 in 0 : vector<1x32x128xf32>, vector<3x32x128xf32> -> vector<4x32x128xf32>
    %31 = arith.maximumf %27, %30 : vector<4x32x128xf32>
    %cst_30 = arith.constant 0xFF80 : bf16
    %32 = vector.broadcast %cst_30 : bf16 to vector<1x32x64xbf16>
    %33 = vector.extract_strided_slice %15 {offsets = [0, 0, 0], sizes = [3, 32, 64], strides = [1, 1, 1]} : vector<4x32x64xbf16> to vector<3x32x64xbf16>
    %34 = tpu.concatenate %32, %33 in 0 : vector<1x32x64xbf16>, vector<3x32x64xbf16> -> vector<4x32x64xbf16>
    %35 = arith.maximumf %34, %9 : vector<4x32x64xbf16>
    %36 = arith.maximumf %35, %11 : vector<4x32x64xbf16>
    %37 = arith.maximumf %11, %13 : vector<4x32x64xbf16>
    %38 = arith.maximumf %37, %15 : vector<4x32x64xbf16>
    %39 = tpu.concatenate %36, %38 in 0 : vector<4x32x64xbf16>, vector<4x32x64xbf16> -> vector<8x32x64xbf16>
    %40 = vector.shape_cast %39 : vector<8x32x64xbf16> to vector<256x64xbf16>
    %cst_31 = arith.constant dense<0.000000e+00> : vector<256x32xf32>
    %41 = tpu.matmul %40, %2, %cst_31 {dimension_numbers = #tpu.dot_dimension_numbers<[1], [0], [0], [1], [0, 0, 1, 1], [], []>} : vector<256x64xbf16>, vector<64x32xbf16>, vector<256x32xf32> -> vector<256x32xf32>
    %42 = vector.shape_cast %41 : vector<256x32xf32> to vector<8x32x32xf32>
    %43 = vector.shape_cast %3 : vector<1x32xf32> to vector<1x1x32xf32>
    %44 = vector.broadcast %43 : vector<1x1x32xf32> to vector<8x32x32xf32>
    %45 = arith.addf %42, %44 : vector<8x32x32xf32>
    %cst_32 = arith.constant 0.000000e+00 : f32
    %46 = vector.broadcast %cst_32 : f32 to vector<8x32x32xf32>
    %47 = arith.maximumf %45, %46 : vector<8x32x32xf32>
    %48 = tpu.iota {dimensions = array<i32: 1>} : vector<8x32x32xi32>
    %c8_i32 = arith.constant 8 : i32
    %c0_i32 = arith.constant 0 : i32
    %49 = arith.cmpi eq, %c8_i32, %c0_i32 : i32
    %c1_i32 = arith.constant 1 : i32
    %50 = arith.select %49, %c1_i32, %c8_i32 : i32
    %51 = vector.broadcast %50 : i32 to vector<8x32x32xi32>
    %52 = arith.remsi %48, %51 : vector<8x32x32xi32>
    %c0_i32_33 = arith.constant 0 : i32
    %53 = vector.broadcast %c0_i32_33 : i32 to vector<8x32x32xi32>
    %54 = arith.cmpi ne, %52, %53 : vector<8x32x32xi32>
    %c0_i32_34 = arith.constant 0 : i32
    %55 = vector.broadcast %c0_i32_34 : i32 to vector<8x32x32xi32>
    %56 = arith.cmpi slt, %52, %55 : vector<8x32x32xi32>
    %c0_i32_35 = arith.constant 0 : i32
    %57 = arith.cmpi slt, %50, %c0_i32_35 : i32
    %58 = vector.broadcast %57 : i1 to vector<8x32x32xi1>
    %59 = vector.broadcast %58 : vector<8x32x32xi1> to vector<8x32x32xi1>
    %60 = arith.xori %56, %59 : vector<8x32x32xi1>
    %61 = arith.andi %60, %54 : vector<8x32x32xi1>
    %62 = vector.broadcast %50 : i32 to vector<8x32x32xi32>
    %63 = arith.addi %52, %62 : vector<8x32x32xi32>
    %64 = arith.select %61, %63, %52 : vector<8x32x32xi1>, vector<8x32x32xi32>
    %c0_i32_36 = arith.constant 0 : i32
    %65 = vector.broadcast %c0_i32_36 : i32 to vector<8x32x32xi32>
    %66 = arith.cmpi eq, %64, %65 : vector<8x32x32xi32>
    %c1_i32_37 = arith.constant 1 : i32
    %67 = tpu.dynamic_rotate %47 by %c1_i32_37 dim 1 : vector<8x32x32xf32>, i32 -> vector<8x32x32xf32>
    %cst_38 = arith.constant 0.000000e+00 : f32
    %68 = vector.broadcast %cst_38 : f32 to vector<8x32x32xf32>
    %69 = arith.select %66, %68, %67 : vector<8x32x32xi1>, vector<8x32x32xf32>
    %c7_i32 = arith.constant 7 : i32
    %70 = vector.broadcast %c7_i32 : i32 to vector<8x32x32xi32>
    %71 = arith.cmpi eq, %64, %70 : vector<8x32x32xi32>
    %c31_i32 = arith.constant 31 : i32
    %72 = tpu.dynamic_rotate %47 by %c31_i32 dim 1 : vector<8x32x32xf32>, i32 -> vector<8x32x32xf32>
    %cst_39 = arith.constant 0.000000e+00 : f32
    %73 = vector.broadcast %cst_39 : f32 to vector<8x32x32xf32>
    %74 = arith.select %71, %73, %72 : vector<8x32x32xi1>, vector<8x32x32xf32>
    %75 = tpu.concatenate %69, %47, %74 in 2 : vector<8x32x32xf32>, vector<8x32x32xf32>, vector<8x32x32xf32> -> vector<8x32x96xf32>
    %76 = arith.truncf %75 : vector<8x32x96xf32> to vector<8x32x96xbf16>
    %77 = vector.shape_cast %76 : vector<8x32x96xbf16> to vector<256x96xbf16>
    %cst_40 = arith.constant dense<0.000000e+00> : vector<256x128xf32>
    %78 = tpu.matmul %77, %4, %cst_40 {dimension_numbers = #tpu.dot_dimension_numbers<[1], [0], [0], [1], [0, 0, 1, 1], [], []>} : vector<256x96xbf16>, vector<96x128xbf16>, vector<256x128xf32> -> vector<256x128xf32>
    %79 = vector.shape_cast %78 : vector<256x128xf32> to vector<8x32x128xf32>
    %80 = vector.shape_cast %5 : vector<1x128xf32> to vector<1x1x128xf32>
    %81 = vector.broadcast %80 : vector<1x1x128xf32> to vector<8x32x128xf32>
    %82 = arith.addf %79, %81 : vector<8x32x128xf32>
    %cst_41 = arith.constant 0.000000e+00 : f32
    %83 = vector.broadcast %cst_41 : f32 to vector<8x32x128xf32>
    %84 = arith.maximumf %82, %83 : vector<8x32x128xf32>
    %85 = vector.extract_strided_slice %84 {offsets = [0, 0, 0], sizes = [4, 32, 128], strides = [1, 1, 1]} : vector<8x32x128xf32> to vector<4x32x128xf32>
    %86 = vector.extract_strided_slice %84 {offsets = [4, 0, 0], sizes = [4, 32, 128], strides = [1, 1, 1]} : vector<8x32x128xf32> to vector<4x32x128xf32>
    %87 = arith.maximumf %85, %86 : vector<4x32x128xf32>
    %cst_42 = arith.constant 0.000000e+00 : f32
    %88 = vector.broadcast %cst_42 : f32 to vector<1x32x128xf32>
    %89 = vector.extract_strided_slice %86 {offsets = [0, 0, 0], sizes = [3, 32, 128], strides = [1, 1, 1]} : vector<4x32x128xf32> to vector<3x32x128xf32>
    %90 = tpu.concatenate %88, %89 in 0 : vector<1x32x128xf32>, vector<3x32x128xf32> -> vector<4x32x128xf32>
    %91 = arith.maximumf %87, %90 : vector<4x32x128xf32>
    %92 = arith.truncf %47 : vector<8x32x32xf32> to vector<8x32x32xbf16>
    %93 = vector.extract_strided_slice %92 {offsets = [0, 0, 0], sizes = [4, 32, 32], strides = [1, 1, 1]} : vector<8x32x32xbf16> to vector<4x32x32xbf16>
    %94 = vector.extract_strided_slice %92 {offsets = [4, 0, 0], sizes = [4, 32, 32], strides = [1, 1, 1]} : vector<8x32x32xbf16> to vector<4x32x32xbf16>
    %cst_43 = arith.constant 0.000000e+00 : bf16
    %95 = vector.broadcast %cst_43 : bf16 to vector<1x32x32xbf16>
    %96 = vector.extract_strided_slice %94 {offsets = [0, 0, 0], sizes = [3, 32, 32], strides = [1, 1, 1]} : vector<4x32x32xbf16> to vector<3x32x32xbf16>
    %97 = tpu.concatenate %95, %96 in 0 : vector<1x32x32xbf16>, vector<3x32x32xbf16> -> vector<4x32x32xbf16>
    %98 = tpu.concatenate %97, %93, %94 in 2 : vector<4x32x32xbf16>, vector<4x32x32xbf16>, vector<4x32x32xbf16> -> vector<4x32x96xbf16>
    %99 = vector.shape_cast %98 : vector<4x32x96xbf16> to vector<128x96xbf16>
    %cst_44 = arith.constant dense<0.000000e+00> : vector<128x128xf32>
    %100 = tpu.matmul %99, %6, %cst_44 {dimension_numbers = #tpu.dot_dimension_numbers<[1], [0], [0], [1], [0, 0, 1, 1], [], []>} : vector<128x96xbf16>, vector<96x128xbf16>, vector<128x128xf32> -> vector<128x128xf32>
    %101 = vector.shape_cast %100 : vector<128x128xf32> to vector<4x32x128xf32>
    %102 = vector.shape_cast %7 : vector<1x128xf32> to vector<1x1x128xf32>
    %103 = vector.broadcast %102 : vector<1x1x128xf32> to vector<4x32x128xf32>
    %104 = arith.addf %101, %103 : vector<4x32x128xf32>
    %cst_45 = arith.constant 0.000000e+00 : f32
    %105 = vector.broadcast %cst_45 : f32 to vector<4x32x128xf32>
    %106 = arith.maximumf %104, %105 : vector<4x32x128xf32>
    %107 = arith.addf %91, %106 : vector<4x32x128xf32>
    %108 = arith.addf %107, %31 : vector<4x32x128xf32>
    %c0_46 = arith.constant 0 : index
    %c0_47 = arith.constant 0 : index
    %c0_48 = arith.constant 0 : index
    %109 = vector.load %arg10[%c0_46, %c0_47, %c0_48] : memref<4x32x128xf32, #tpu.memory_space<vmem>>, vector<4x32x128xf32>
    tpu.vector_store %arg10[%c0_46, %c0_47, %c0_48], %108 {strides = array<i32>} : memref<4x32x128xf32, #tpu.memory_space<vmem>>, vector<4x32x128xf32>,
    return
  }
  func.func @transform_0(%arg0: i32) -> (i32, i32, i32, i32) {
    %c0_i32 = arith.constant 0 : i32
    %c0_i32_0 = arith.constant 0 : i32
    %c0_i32_1 = arith.constant 0 : i32
    %c0_i32_2 = arith.constant 0 : i32
    return %c0_i32, %c0_i32_0, %arg0, %c0_i32_1 : i32, i32, i32, i32
  }
  func.func @transform_1(%arg0: i32) -> (i32, i32) {
    %c0_i32 = arith.constant 0 : i32
    %c0_i32_0 = arith.constant 0 : i32
    %c0_i32_1 = arith.constant 0 : i32
    return %c0_i32, %c0_i32_0 : i32, i32
  }
  func.func @transform_2(%arg0: i32) -> (i32, i32) {
    %c0_i32 = arith.constant 0 : i32
    %c0_i32_0 = arith.constant 0 : i32
    %c0_i32_1 = arith.constant 0 : i32
    return %c0_i32, %c0_i32_0 : i32, i32
  }
  func.func @transform_3(%arg0: i32) -> (i32, i32) {
    %c0_i32 = arith.constant 0 : i32
    %c0_i32_0 = arith.constant 0 : i32
    %c0_i32_1 = arith.constant 0 : i32
    return %c0_i32, %c0_i32_0 : i32, i32
  }
  func.func @transform_4(%arg0: i32) -> (i32, i32) {
    %c0_i32 = arith.constant 0 : i32
    %c0_i32_0 = arith.constant 0 : i32
    %c0_i32_1 = arith.constant 0 : i32
    return %c0_i32, %c0_i32_0 : i32, i32
  }
  func.func @transform_5(%arg0: i32) -> (i32, i32) {
    %c0_i32 = arith.constant 0 : i32
    %c0_i32_0 = arith.constant 0 : i32
    %c0_i32_1 = arith.constant 0 : i32
    return %c0_i32, %c0_i32_0 : i32, i32
  }
  func.func @transform_6(%arg0: i32) -> (i32, i32) {
    %c0_i32 = arith.constant 0 : i32
    %c0_i32_0 = arith.constant 0 : i32
    %c0_i32_1 = arith.constant 0 : i32
    return %c0_i32, %c0_i32_0 : i32, i32
  }
  func.func @transform_7(%arg0: i32) -> (i32, i32) {
    %c0_i32 = arith.constant 0 : i32
    %c0_i32_0 = arith.constant 0 : i32
    %c0_i32_1 = arith.constant 0 : i32
    return %c0_i32, %c0_i32_0 : i32, i32
  }
  func.func @transform_8(%arg0: i32) -> (i32, i32) {
    %c0_i32 = arith.constant 0 : i32
    %c0_i32_0 = arith.constant 0 : i32
    %c0_i32_1 = arith.constant 0 : i32
    return %c0_i32, %c0_i32_0 : i32, i32
  }
  func.func @transform_9(%arg0: i32) -> (i32, i32, i32) {
    %c0_i32 = arith.constant 0 : i32
    %c0_i32_0 = arith.constant 0 : i32
    %c0_i32_1 = arith.constant 0 : i32
    return %c0_i32, %arg0, %c0_i32_0 : i32, i32, i32
  }
}

</mosaic_0001>

<llo_original>
// kernel: block_a_forward.1
$region0: #{block_a_forward.1}
  #allocation0 [shape = 'u32[]', space=smem, size = 0x4, offset = 0x4, fixed_abs, tag = 'smem constant byte address 0x4 - core index']
  #allocation1 [shape = 'u32[144,128]{1,0:T(1,128)}', space=vmem, size = 0x12000, scoped, tag = 'internal scratch']
  #allocation18 [shape = 's32[]', space=sflag, size = 0x4, offset = 0, fixed_abs, tag = 'sflag constant byte address 0x0 - dummy sync flag']
  #allocation20 [shape = 's32[]', space=sflag, size = 0x4, offset = 0, fixed_abs, tag = 'sflag constant byte address 0x0 - dummy sync flag']
  %s0 = inlined_call_operand.hbm [shape: bf16[4,4,64,64], index: 0, kind: input, shape index: {}]
  %s1 = inlined_call_operand.hbm [shape: bf16[64,128], index: 1, kind: input, shape index: {}]
  %s2 = inlined_call_operand.hbm [shape: f32[1,128], index: 2, kind: input, shape index: {}]
  %s3 = inlined_call_operand.hbm [shape: bf16[64,32], index: 3, kind: input, shape index: {}]
  %s4 = inlined_call_operand.hbm [shape: f32[1,32], index: 4, kind: input, shape index: {}]
  %s5 = inlined_call_operand.hbm [shape: bf16[96,128], index: 5, kind: input, shape index: {}]
  %s6 = inlined_call_operand.hbm [shape: f32[1,128], index: 6, kind: input, shape index: {}]
  %s7 = inlined_call_operand.hbm [shape: bf16[96,128], index: 7, kind: input, shape index: {}]
  %s8 = inlined_call_operand.hbm [shape: f32[1,128], index: 8, kind: input, shape index: {}]
  %s9 = inlined_call_operand.hbm [shape: f32[4,64,128], index: 9, kind: output, shape index: {}]
  %s10 = sld [smem:[#allocation0]]
  $region105: #{block_a_forward.1} parent=0
    _
  %s12 = ssub.s32 1, %s10
  %s13 = scalar_select 0, %s12, %s10
  $region1: #{block_a_forward.1} parent=0
    #allocation2 [shape = 'u8[262144]{0}', space=vmem, size = 0x40000, scoped, tag = 'input window, operand 0']
    #allocation3 [shape = 's32[2]{0}', space=sflag, size = 0x8, scoped, tag = 'scoped memory for block_a_forward.1']
    #allocation4 [shape = 's32[2]{0}', space=sflag, size = 0x8, scoped, tag = 'scoped memory for block_a_forward.1']
    #allocation5 [shape = 'u8[16384]{0}', space=vmem, size = 0x4000, scoped, tag = 'input window, operand 1, single buffered']
    #allocation6 [shape = 's32[1]{0}', space=sflag, size = 0x4, scoped, tag = 'scoped memory for block_a_forward.1']
    #allocation7 [shape = 'u8[512]{0}', space=vmem, size = 0x400, scoped, tag = 'input window, operand 2, single buffered']
    #allocation8 [shape = 'u8[16384]{0}', space=vmem, size = 0x4000, scoped, tag = 'input window, operand 3, single buffered']
    #allocation9 [shape = 's32[1]{0}', space=sflag, size = 0x4, scoped, tag = 'scoped memory for block_a_forward.1']
    #allocation10 [shape = 'u8[512]{0}', space=vmem, size = 0x400, scoped, tag = 'input window, operand 4, single buffered']
    #allocation11 [shape = 'u8[24576]{0}', space=vmem, size = 0x6000, scoped, tag = 'input window, operand 5, single buffered']
    #allocation12 [shape = 's32[1]{0}', space=sflag, size = 0x4, scoped, tag = 'scoped memory for block_a_forward.1']
    #allocation13 [shape = 'u8[512]{0}', space=vmem, size = 0x400, scoped, tag = 'input window, operand 6, single buffered']
    #allocation14 [shape = 'u8[24576]{0}', space=vmem, size = 0x6000, scoped, tag = 'input window, operand 7, single buffered']
    #allocation15 [shape = 's32[1]{0}', space=sflag, size = 0x4, scoped, tag = 'scoped memory for block_a_forward.1']
    #allocation16 [shape = 'u8[512]{0}', space=vmem, size = 0x400, scoped, tag = 'input window, operand 8, single buffered']
    #allocation17 [shape = 'u8[131072]{0}', space=vmem, size = 0x20000, scoped, tag = 'output window, operand 0']
    %14 = vsyncpa [#allocation3], 0
    %s15 = scalar_lea.sflag [#allocation3], 1
    %16 = vsyncpa %s15, 0
    %17 = vsyncpa [#allocation6], 0
    %18 = vsyncpa [#allocation9], 0
    %19 = vsyncpa [#allocation12], 0
    %20 = vsyncpa [#allocation15], 0
    %21 = vsyncpa [#allocation4], 0
    %s22 = scalar_lea.sflag [#allocation4], 1
    %23 = vsyncpa %s22, 0
    loop: start=0, step=1, limit=4
    $region2: #{block_a_forward.1} parent=1 // loop_pre_header
      _
    $region3: #{block_a_forward.1} parent=1 // loop_header
      %s25 = sphi 0, %s29
      %p26 = scmp.ge.s32.totalorder %s25, 4
      %s35 = sphi 0, %s37
      %s38 = sphi 0, %s35
      %s39 = sphi 0, %s38
      %s55 = sphi 0, %s39
      %s59 = sphi 0, %s59
      %s61 = sphi 0, %s59
      %s62 = sphi 0, %s61
      %s76 = sphi 0, %s62
      %s80 = sphi 0, %s80
      %s82 = sphi 0, %s80
      %s83 = sphi 0, %s82
      %s97 = sphi 0, %s83
      %s101 = sphi 0, %s101
      %s103 = sphi 0, %s101
      %s104 = sphi 0, %s103
      %s118 = sphi 0, %s104
      %s122 = sphi 0, %s122
      %s124 = sphi 0, %s122
      %s125 = sphi 0, %s124
      %s139 = sphi 0, %s125
      %s143 = sphi 0, %s143
      %s145 = sphi 0, %s143
      %s146 = sphi 0, %s145
      %s160 = sphi 0, %s146
      %s164 = sphi 0, %s164
      %s166 = sphi 0, %s164
      %s167 = sphi 0, %s166
      %s181 = sphi 0, %s167
      %s185 = sphi 0, %s185
      %s187 = sphi 0, %s185
      %s188 = sphi 0, %s187
      %s202 = sphi 0, %s188
      %s206 = sphi 0, %s206
      %s208 = sphi 0, %s206
      %s209 = sphi 0, %s208
      %s223 = sphi 0, %s209
      %s229 = sphi 0, %s231
      %s232 = sphi 0, %s229
      %s233 = sphi 0, %s232
      %s249 = sphi 0, %s233
    $region4: #{block_a_forward.1} parent=1 // loop_header_branch
      %28 = sbr.rel (%p26) target = $region8
    $region5: #{block_a_forward.1} parent=1 // loop_body
      %s30 = ssub.s32 %s25, 1
      %s31 = ssub.s32 %s25, 2
      %s32 = sadd.s32 %s25, 1
      %s33 = ssub.s32 %s25, %s32
      %p34 = scmp.eq.s32.totalorder %s33, 0
      %s36 = sadd.s32 %s35, 1
      %s37 = scalar_select %p34, %s35, %s36
      %p40 = pneg %p34
      %p41 = scmp.eq.s32.totalorder %s25, 1
      %p42 = por %p40, %p41
      %p43 = scmp.ne.s32.totalorder %s35, %s38
      %p44 = scmp.eq.s32.totalorder %s25, 0
      %p45 = por %p43, %p44
      %p46 = scmp.ne.s32.totalorder %s35, %s38
      %p47 = scmp.eq.s32.totalorder %s30, 1
      %p48 = por %p46, %p47
      %p49 = scmp.ne.s32.totalorder %s38, %s39
      %p50 = scmp.eq.s32.totalorder %s30, 0
      %p51 = por %p49, %p50
      %p52 = scmp.ne.s32.totalorder %s38, %s39
      %p53 = scmp.eq.s32.totalorder %s31, 1
      %p54 = por %p52, %p53
      %p56 = scmp.ne.s32.totalorder %s39, %s55
      %p57 = scmp.eq.s32.totalorder %s31, 0
      %p58 = por %p56, %p57
      %s60 = sadd.s32 %s59, 1
      %p63 = scmp.eq.s32.totalorder %s25, 1
      %p64 = scmp.ne.s32.totalorder %s59, %s61
      %p65 = scmp.eq.s32.totalorder %s25, 0
      %p66 = por %p64, %p65
      %p67 = scmp.ne.s32.totalorder %s59, %s61
      %p68 = scmp.eq.s32.totalorder %s30, 1
      %p69 = por %p67, %p68
      %p70 = scmp.ne.s32.totalorder %s61, %s62
      %p71 = scmp.eq.s32.totalorder %s30, 0
      %p72 = por %p70, %p71
      %p73 = scmp.ne.s32.totalorder %s61, %s62
      %p74 = scmp.eq.s32.totalorder %s31, 1
      %p75 = por %p73, %p74
      %p77 = scmp.ne.s32.totalorder %s62, %s76
      %p78 = scmp.eq.s32.totalorder %s31, 0
      %p79 = por %p77, %p78
      %s81 = sadd.s32 %s80, 1
      %p84 = scmp.eq.s32.totalorder %s25, 1
      %p85 = scmp.ne.s32.totalorder %s80, %s82
      %p86 = scmp.eq.s32.totalorder %s25, 0
      %p87 = por %p85, %p86
      %p88 = scmp.ne.s32.totalorder %s80, %s82
      %p89 = scmp.eq.s32.totalorder %s30, 1
      %p90 = por %p88, %p89
      %p91 = scmp.ne.s32.totalorder %s82, %s83
      %p92 = scmp.eq.s32.totalorder %s30, 0
      %p93 = por %p91, %p92
      %p94 = scmp.ne.s32.totalorder %s82, %s83
      %p95 = scmp.eq.s32.totalorder %s31, 1
      %p96 = por %p94, %p95
      %p98 = scmp.ne.s32.totalorder %s83, %s97
      %p99 = scmp.eq.s32.totalorder %s31, 0
      %p100 = por %p98, %p99
      %s102 = sadd.s32 %s101, 1
      %p105 = scmp.eq.s32.totalorder %s25, 1
      %p106 = scmp.ne.s32.totalorder %s101, %s103
      %p107 = scmp.eq.s32.totalorder %s25, 0
      %p108 = por %p106, %p107
      %p109 = scmp.ne.s32.totalorder %s101, %s103
      %p110 = scmp.eq.s32.totalorder %s30, 1
      %p111 = por %p109, %p110
      %p112 = scmp.ne.s32.totalorder %s103, %s104
      %p113 = scmp.eq.s32.totalorder %s30, 0
      %p114 = por %p112, %p113
      %p115 = scmp.ne.s32.totalorder %s103, %s104
      %p116 = scmp.eq.s32.totalorder %s31, 1
      %p117 = por %p115, %p116
      %p119 = scmp.ne.s32.totalorder %s104, %s118
      %p120 = scmp.eq.s32.totalorder %s31, 0
      %p121 = por %p119, %p120
      %s123 = sadd.s32 %s122, 1
      %p126 = scmp.eq.s32.totalorder %s25, 1
      %p127 = scmp.ne.s32.totalorder %s122, %s124
      %p128 = scmp.eq.s32.totalorder %s25, 0
      %p129 = por %p127, %p128
      %p130 = scmp.ne.s32.totalorder %s122, %s124
      %p131 = scmp.eq.s32.totalorder %s30, 1
      %p132 = por %p130, %p131
      %p133 = scmp.ne.s32.totalorder %s124, %s125
      %p134 = scmp.eq.s32.totalorder %s30, 0
      %p135 = por %p133, %p134
      %p136 = scmp.ne.s32.totalorder %s124, %s125
      %p137 = scmp.eq.s32.totalorder %s31, 1
      %p138 = por %p136, %p137
      %p140 = scmp.ne.s32.totalorder %s125, %s139
      %p141 = scmp.eq.s32.totalorder %s31, 0
      %p142 = por %p140, %p141
      %s144 = sadd.s32 %s143, 1
      %p147 = scmp.eq.s32.totalorder %s25, 1
      %p148 = scmp.ne.s32.totalorder %s143, %s145
      %p149 = scmp.eq.s32.totalorder %s25, 0
      %p150 = por %p148, %p149
      %p151 = scmp.ne.s32.totalorder %s143, %s145
      %p152 = scmp.eq.s32.totalorder %s30, 1
      %p153 = por %p151, %p152
      %p154 = scmp.ne.s32.totalorder %s145, %s146
      %p155 = scmp.eq.s32.totalorder %s30, 0
      %p156 = por %p154, %p155
      %p157 = scmp.ne.s32.totalorder %s145, %s146
      %p158 = scmp.eq.s32.totalorder %s31, 1
      %p159 = por %p157, %p158
      %p161 = scmp.ne.s32.totalorder %s146, %s160
      %p162 = scmp.eq.s32.totalorder %s31, 0
      %p163 = por %p161, %p162
      %s165 = sadd.s32 %s164, 1
      %p168 = scmp.eq.s32.totalorder %s25, 1
      %p169 = scmp.ne.s32.totalorder %s164, %s166
      %p170 = scmp.eq.s32.totalorder %s25, 0
      %p171 = por %p169, %p170
      %p172 = scmp.ne.s32.totalorder %s164, %s166
      %p173 = scmp.eq.s32.totalorder %s30, 1
      %p174 = por %p172, %p173
      %p175 = scmp.ne.s32.totalorder %s166, %s167
      %p176 = scmp.eq.s32.totalorder %s30, 0
      %p177 = por %p175, %p176
      %p178 = scmp.ne.s32.totalorder %s166, %s167
      %p179 = scmp.eq.s32.totalorder %s31, 1
      %p180 = por %p178, %p179
      %p182 = scmp.ne.s32.totalorder %s167, %s181
      %p183 = scmp.eq.s32.totalorder %s31, 0
      %p184 = por %p182, %p183
      %s186 = sadd.s32 %s185, 1
      %p189 = scmp.eq.s32.totalorder %s25, 1
      %p190 = scmp.ne.s32.totalorder %s185, %s187
      %p191 = scmp.eq.s32.totalorder %s25, 0
      %p192 = por %p190, %p191
      %p193 = scmp.ne.s32.totalorder %s185, %s187
      %p194 = scmp.eq.s32.totalorder %s30, 1
      %p195 = por %p193, %p194
      %p196 = scmp.ne.s32.totalorder %s187, %s188
      %p197 = scmp.eq.s32.totalorder %s30, 0
      %p198 = por %p196, %p197
      %p199 = scmp.ne.s32.totalorder %s187, %s188
      %p200 = scmp.eq.s32.totalorder %s31, 1
      %p201 = por %p199, %p200
      %p203 = scmp.ne.s32.totalorder %s188, %s202
      %p204 = scmp.eq.s32.totalorder %s31, 0
      %p205 = por %p203, %p204
      %s207 = sadd.s32 %s206, 1
      %p210 = scmp.eq.s32.totalorder %s25, 1
      %p211 = scmp.ne.s32.totalorder %s206, %s208
      %p212 = scmp.eq.s32.totalorder %s25, 0
      %p213 = por %p211, %p212
      %p214 = scmp.ne.s32.totalorder %s206, %s208
      %p215 = scmp.eq.s32.totalorder %s30, 1
      %p216 = por %p214, %p215
      %p217 = scmp.ne.s32.totalorder %s208, %s209
      %p218 = scmp.eq.s32.totalorder %s30, 0
      %p219 = por %p217, %p218
      %p220 = scmp.ne.s32.totalorder %s208, %s209
      %p221 = scmp.eq.s32.totalorder %s31, 1
      %p222 = por %p220, %p221
      %p224 = scmp.ne.s32.totalorder %s209, %s223
      %p225 = scmp.eq.s32.totalorder %s31, 0
      %p226 = por %p224, %p225
      %s227 = ssub.s32 %s25, %s32
      %p228 = scmp.eq.s32.totalorder %s227, 0
      %s230 = sadd.s32 %s229, 1
      %s231 = scalar_select %p228, %s229, %s230
      %p234 = pneg %p228
      %p235 = scmp.eq.s32.totalorder %s25, 1
      %p236 = por %p234, %p235
      %p237 = scmp.ne.s32.totalorder %s229, %s232
      %p238 = scmp.eq.s32.totalorder %s25, 0
      %p239 = por %p237, %p238
      %p240 = scmp.ne.s32.totalorder %s229, %s232
      %p241 = scmp.eq.s32.totalorder %s30, 1
      %p242 = por %p240, %p241
      %p243 = scmp.ne.s32.totalorder %s232, %s233
      %p244 = scmp.eq.s32.totalorder %s30, 0
      %p245 = por %p243, %p244
      %p246 = scmp.ne.s32.totalorder %s232, %s233
      %p247 = scmp.eq.s32.totalorder %s31, 1
      %p248 = por %p246, %p247
      %p250 = scmp.ne.s32.totalorder %s233, %s249
      %p251 = scmp.eq.s32.totalorder %s31, 0
      %p252 = por %p250, %p251
      %p253 = scmp.le.s32.totalorder 1, %s25
      %p254 = scmp.lt.s32.totalorder %s25, 3
      %p255 = pnand %p253, %p254
      %p256 = pneg %p255
      // Predicated region
      $region9: #{block_a_forward.1} parent=5 // pred_check
        _
      $region10: #{block_a_forward.1} parent=5 // pred_check_branch
        %258 = sbr.rel (%p255) target = $region12
      $region11: #{block_a_forward.1} parent=5 // pred_region
        %s259 = ssub.s32 %s25, 1
        // Predicated region
        $region13: #{block_a_forward.1} parent=11 // pred_check
          %p260 = pneg %p72
        $region14: #{block_a_forward.1} parent=11 // pred_check_branch
          %262 = sbr.rel (%p260) target = $region16
        $region15: #{block_a_forward.1} parent=11 // pred_region
          %s264 = ssub.s32 512, 512
          %265 = vsyncadd [#allocation6], %s264
          %s266 = sshll.u32 [#allocation5], 4
          %s267 = int_to_ptr.vmem [resolvable:$true] %s266
          %272 = dma.hbm_to_vmem [thread:$0]  %s1, 512, %s267, [#allocation6], 64, 64, 4
        $region16: #{block_a_forward.1} parent=11 // pred_fallthru
          _
        // Predicated region
        $region17: #{block_a_forward.1} parent=11 // pred_check
          %p273 = pneg %p93
        $region18: #{block_a_forward.1} parent=11 // pred_check_branch
          %275 = sbr.rel (%p273) target = $region20
        $region19: #{block_a_forward.1} parent=11 // pred_region
          %s277 = ssub.s32 16, 16
          %278 = vsyncadd [#allocation6], %s277
          %s280 = sshll.u32 [#allocation7], 4
          %s281 = int_to_ptr.vmem [resolvable:$true] %s280
          %283 = dma.hbm_to_vmem [thread:$0]  %s2, 16, %s281, [#allocation6]
        $region20: #{block_a_forward.1} parent=11 // pred_fallthru
          _
        // Predicated region
        $region21: #{block_a_forward.1} parent=11 // pred_check
          %p284 = pneg %p114
        $region22: #{block_a_forward.1} parent=11 // pred_check_branch
          %286 = sbr.rel (%p284) target = $region24
        $region23: #{block_a_forward.1} parent=11 // pred_region
          %s288 = ssub.s32 512, 512
          %289 = vsyncadd [#allocation9], %s288
          %s290 = sshll.u32 [#allocation8], 4
          %s291 = int_to_ptr.vmem [resolvable:$true] %s290
          %296 = dma.hbm_to_vmem [thread:$0]  %s3, 512, %s291, [#allocation9], 64, 64, 4
        $region24: #{block_a_forward.1} parent=11 // pred_fallthru
          _
        // Predicated region
        $region25: #{block_a_forward.1} parent=11 // pred_check
          %p297 = pneg %p135
        $region26: #{block_a_forward.1} parent=11 // pred_check_branch
          %299 = sbr.rel (%p297) target = $region28
        $region27: #{block_a_forward.1} parent=11 // pred_region
          %s301 = ssub.s32 16, 16
          %302 = vsyncadd [#allocation9], %s301
          %s304 = sshll.u32 [#allocation10], 4
          %s305 = int_to_ptr.vmem [resolvable:$true] %s304
          %307 = dma.hbm_to_vmem [thread:$0]  %s4, 16, %s305, [#allocation9]
        $region28: #{block_a_forward.1} parent=11 // pred_fallthru
          _
        // Predicated region
        $region29: #{block_a_forward.1} parent=11 // pred_check
          %p308 = pneg %p156
        $region30: #{block_a_forward.1} parent=11 // pred_check_branch
          %310 = sbr.rel (%p308) target = $region32
        $region31: #{block_a_forward.1} parent=11 // pred_region
          %s312 = ssub.s32 768, 768
          %313 = vsyncadd [#allocation12], %s312
          %s314 = sshll.u32 [#allocation11], 4
          %s315 = int_to_ptr.vmem [resolvable:$true] %s314
          %320 = dma.hbm_to_vmem [thread:$0]  %s5, 768, %s315, [#allocation12], 64, 64, 4
        $region32: #{block_a_forward.1} parent=11 // pred_fallthru
          _
        // Predicated region
        $region33: #{block_a_forward.1} parent=11 // pred_check
          %p321 = pneg %p177
        $region34: #{block_a_forward.1} parent=11 // pred_check_branch
          %323 = sbr.rel (%p321) target = $region36
        $region35: #{block_a_forward.1} parent=11 // pred_region
          %s325 = ssub.s32 16, 16
          %326 = vsyncadd [#allocation12], %s325
          %s328 = sshll.u32 [#allocation13], 4
          %s329 = int_to_ptr.vmem [resolvable:$true] %s328
          %331 = dma.hbm_to_vmem [thread:$0]  %s6, 16, %s329, [#allocation12]
        $region36: #{block_a_forward.1} parent=11 // pred_fallthru
          _
        // Predicated region
        $region37: #{block_a_forward.1} parent=11 // pred_check
          %p332 = pneg %p198
        $region38: #{block_a_forward.1} parent=11 // pred_check_branch
          %334 = sbr.rel (%p332) target = $region40
        $region39: #{block_a_forward.1} parent=11 // pred_region
          %s336 = ssub.s32 768, 768
          %337 = vsyncadd [#allocation15], %s336
          %s338 = sshll.u32 [#allocation14], 4
          %s339 = int_to_ptr.vmem [resolvable:$true] %s338
          %344 = dma.hbm_to_vmem [thread:$0]  %s7, 768, %s339, [#allocation15], 64, 64, 4
        $region40: #{block_a_forward.1} parent=11 // pred_fallthru
          _
        // Predicated region
        $region41: #{block_a_forward.1} parent=11 // pred_check
          %p345 = pneg %p219
        $region42: #{block_a_forward.1} parent=11 // pred_check_branch
          %347 = sbr.rel (%p345) target = $region44
        $region43: #{block_a_forward.1} parent=11 // pred_region
          %s349 = ssub.s32 16, 16
          %350 = vsyncadd [#allocation15], %s349
          %s352 = sshll.u32 [#allocation16], 4
          %s353 = int_to_ptr.vmem [resolvable:$true] %s352
          %355 = dma.hbm_to_vmem [thread:$0]  %s8, 16, %s353, [#allocation15]
        $region44: #{block_a_forward.1} parent=11 // pred_fallthru
          _
      $region12: #{block_a_forward.1} parent=5 // pred_fallthru
        _
      %p356 = scmp.lt.s32.totalorder %s25, 2
      // Predicated region
      $region45: #{block_a_forward.1} parent=5 // pred_check
        %p357 = pneg %p356
      $region46: #{block_a_forward.1} parent=5 // pred_check_branch
        %359 = sbr.rel (%p357) target = $region48
      $region47: #{block_a_forward.1} parent=5 // pred_region
        // Predicated region
        $region49: #{block_a_forward.1} parent=47 // pred_check
          %p360 = pneg %p45
        $region50: #{block_a_forward.1} parent=47 // pred_check_branch
          %362 = sbr.rel (%p360) target = $region52
        $region51: #{block_a_forward.1} parent=47 // pred_region
          #allocation19 [shape = 'u32[6]{0}', space=smem, size = 0x18, scoped, tag = 'DMA stride descriptor']
          %s363 = sand.u32 %s35, 1
          %s364 = scalar_lea.sflag [#allocation3], %s363
          %s365 = sand.u32 %s35, 1
          %s366 = smul.addr %s365, 256
          %s367 = scalar_lea.vmem [#allocation2], %s366
          %s368 = smul.u32 4, %s25
          %s370 = ssub.s32 4096, 4096
          %371 = vsyncadd %s364, %s370
          %s372 = smul.addr %s368, 64
          %s373 = scalar_lea.hbm %s0, %s372
          %s375 = sshll.u32 1, 14
          %s376 = sxor.u32 4294967295, %s375
          %s378 = sld [smem:[#allocation0]]
          %s379 = sadd.s32 2, %s378
          %s381 = sshll.u32 7, 26
          %s382 = sxor.u32 4294967295, %s381
          %s383 = sand.u32 0, %s382
          %s384 = sshll.u32 %s379, 26
          %s385 = sor.u32 %s383, %s384
          %s386 = sshll.u32 %s367, 4
          %s387 = int_to_ptr.vmem [resolvable:$true] %s386
          %393 = sst [smem:[#allocation19]] 512
          %s394 = scalar_lea.smem [#allocation19], 1
          %395 = sst [smem:[%s394]] 256
          %s396 = scalar_lea.smem [#allocation19], 2
          %397 = sst [smem:[%s396]] 4
          %s398 = scalar_lea.smem [#allocation19], 3
          %399 = sst [smem:[%s398]] 64
          %s400 = scalar_lea.smem [#allocation19], 4
          %401 = sst [smem:[%s400]] 64
          %s402 = scalar_lea.smem [#allocation19], 5
          %403 = sst [smem:[%s402]] 4
          %405 = dma.general %s373, 4096, %s387, %s364, [#allocation18], [#allocation19], %s385, 0
        $region52: #{block_a_forward.1} parent=47 // pred_fallthru
          _
      $region48: #{block_a_forward.1} parent=5 // pred_fallthru
        _
      %p406 = scmp.le.s32.totalorder 1, %s25
      %p407 = scmp.lt.s32.totalorder %s25, 3
      %p408 = pnand %p406, %p407
      %p409 = pneg %p408
      // Predicated region
      $region53: #{block_a_forward.1} parent=5 // pred_check
        _
      $region54: #{block_a_forward.1} parent=5 // pred_check_branch
        %411 = sbr.rel (%p408) target = $region56
      $region55: #{block_a_forward.1} parent=5 // pred_region
        %s412 = ssub.s32 %s25, 1
        %s413 = sand.u32 %s38, 1
        %s414 = scalar_lea.sflag [#allocation3], %s413
        %s415 = sand.u32 %s38, 1
        %s416 = smul.addr %s415, 256
        %s417 = scalar_lea.vmem [#allocation2], %s416
        // Predicated region
        $region57: #{block_a_forward.1} parent=55 // pred_check
          %p418 = pneg %p51
        $region58: #{block_a_forward.1} parent=55 // pred_check_branch
          %420 = sbr.rel (%p418) target = $region60
        $region59: #{block_a_forward.1} parent=55 // pred_region
          %421 = dma.done %s414, 4096
        $region60: #{block_a_forward.1} parent=55 // pred_fallthru
          _
        // Predicated region
        $region61: #{block_a_forward.1} parent=55 // pred_check
          %p422 = pneg %p72
        $region62: #{block_a_forward.1} parent=55 // pred_check_branch
          %424 = sbr.rel (%p422) target = $region64
        $region63: #{block_a_forward.1} parent=55 // pred_region
          %425 = dma.done [#allocation6], 512
        $region64: #{block_a_forward.1} parent=55 // pred_fallthru
          _
        // Predicated region
        $region65: #{block_a_forward.1} parent=55 // pred_check
          %p426 = pneg %p93
        $region66: #{block_a_forward.1} parent=55 // pred_check_branch
          %428 = sbr.rel (%p426) target = $region68
        $region67: #{block_a_forward.1} parent=55 // pred_region
          %429 = dma.done [#allocation6], 16
        $region68: #{block_a_forward.1} parent=55 // pred_fallthru
          _
        // Predicated region
        $region69: #{block_a_forward.1} parent=55 // pred_check
          %p430 = pneg %p114
        $region70: #{block_a_forward.1} parent=55 // pred_check_branch
          %432 = sbr.rel (%p430) target = $region72
        $region71: #{block_a_forward.1} parent=55 // pred_region
          %433 = dma.done [#allocation9], 512
        $region72: #{block_a_forward.1} parent=55 // pred_fallthru
          _
        // Predicated region
        $region73: #{block_a_forward.1} parent=55 // pred_check
          %p434 = pneg %p135
        $region74: #{block_a_forward.1} parent=55 // pred_check_branch
          %436 = sbr.rel (%p434) target = $region76
        $region75: #{block_a_forward.1} parent=55 // pred_region
          %437 = dma.done [#allocation9], 16
        $region76: #{block_a_forward.1} parent=55 // pred_fallthru
          _
        // Predicated region
        $region77: #{block_a_forward.1} parent=55 // pred_check
          %p438 = pneg %p156
        $region78: #{block_a_forward.1} parent=55 // pred_check_branch
          %440 = sbr.rel (%p438) target = $region80
        $region79: #{block_a_forward.1} parent=55 // pred_region
          %441 = dma.done [#allocation12], 768
        $region80: #{block_a_forward.1} parent=55 // pred_fallthru
          _
        // Predicated region
        $region81: #{block_a_forward.1} parent=55 // pred_check
          %p442 = pneg %p177
        $region82: #{block_a_forward.1} parent=55 // pred_check_branch
          %444 = sbr.rel (%p442) target = $region84
        $region83: #{block_a_forward.1} parent=55 // pred_region
          %445 = dma.done [#allocation12], 16
        $region84: #{block_a_forward.1} parent=55 // pred_fallthru
          _
        // Predicated region
        $region85: #{block_a_forward.1} parent=55 // pred_check
          %p446 = pneg %p198
        $region86: #{block_a_forward.1} parent=55 // pred_check_branch
          %448 = sbr.rel (%p446) target = $region88
        $region87: #{block_a_forward.1} parent=55 // pred_region
          %449 = dma.done [#allocation15], 768
        $region88: #{block_a_forward.1} parent=55 // pred_fallthru
          _
        // Predicated region
        $region89: #{block_a_forward.1} parent=55 // pred_check
          %p450 = pneg %p219
        $region90: #{block_a_forward.1} parent=55 // pred_check_branch
          %452 = sbr.rel (%p450) target = $region92
        $region91: #{block_a_forward.1} parent=55 // pred_region
          %453 = dma.done [#allocation15], 16
        $region92: #{block_a_forward.1} parent=55 // pred_fallthru
          _
        %s454 = sand.u32 %s38, 1
        %s455 = scalar_lea.sflag [#allocation3], %s454
        %s456 = sand.u32 %s38, 1
        %s457 = smul.addr %s456, 256
        %s458 = scalar_lea.vmem [#allocation2], %s457
        %p459 = pneg %p51
        %p460 = pneg %p48
        %p461 = pneg %p72
        %p462 = pneg %p69
        %p463 = pneg %p93
        %p464 = pneg %p90
        %p465 = pneg %p114
        %p466 = pneg %p111
        %p467 = pneg %p135
        %p468 = pneg %p132
        %p469 = pneg %p156
        %p470 = pneg %p153
        %p471 = pneg %p177
        %p472 = pneg %p174
        %p473 = pneg %p198
        %p474 = pneg %p195
        %p475 = pneg %p219
        %p476 = pneg %p216
        %p477 = pneg %p245
        %p478 = pneg %p242
        %s479 = sand.u32 %s232, 1
        %s480 = scalar_lea.sflag [#allocation4], %s479
        %s481 = sand.u32 %s232, 1
        %s482 = smul.addr %s481, 128
        %s483 = scalar_lea.vmem [#allocation17], %s482
        %s484 = smul.u32 4, %s30
        %s485 = smul.u32 4, %s30
        %v487 = vld [vmem:[#allocation5] sm:$0xf]
        %v488 = vld [vmem:[#allocation5 + $0x4] sm:$0xf]
        %v489 = vld [vmem:[#allocation5 + $0x8] sm:$0xf]
        %v490 = vld [vmem:[#allocation5 + $0xc] sm:$0xf]
        %v491 = vld [vmem:[#allocation5 + $0x10] sm:$0xf]
        %v492 = vld [vmem:[#allocation5 + $0x14] sm:$0xf]
        %v493 = vld [vmem:[#allocation5 + $0x18] sm:$0xf]
        %v494 = vld [vmem:[#allocation5 + $0x1c] sm:$0xf]
        %v495 = vld [vmem:[#allocation7] sm:$0x1]
        %v496 = vld [vmem:[#allocation8] sm:$0xf]
        %v497 = vld [vmem:[#allocation8 + $0x4] sm:$0xf]
        %v498 = vld [vmem:[#allocation8 + $0x8] sm:$0xf]
        %v499 = vld [vmem:[#allocation8 + $0xc] sm:$0xf]
        %v500 = vld [vmem:[#allocation8 + $0x10] sm:$0xf]
        %v501 = vld [vmem:[#allocation8 + $0x14] sm:$0xf]
        %v502 = vld [vmem:[#allocation8 + $0x18] sm:$0xf]
        %v503 = vld [vmem:[#allocation8 + $0x1c] sm:$0xf]
        %v504 = vld [vmem:[#allocation10] sm:$0x1]
        %v505 = vld [vmem:[#allocation11] sm:$0xf]
        %v506 = vld [vmem:[#allocation11 + $0x4] sm:$0xf]
        %v507 = vld [vmem:[#allocation11 + $0x8] sm:$0xf]
        %v508 = vld [vmem:[#allocation11 + $0xc] sm:$0xf]
        %v509 = vld [vmem:[#allocation11 + $0x10] sm:$0xf]
        %v510 = vld [vmem:[#allocation11 + $0x14] sm:$0xf]
        %v511 = vld [vmem:[#allocation11 + $0x18] sm:$0xf]
        %v512 = vld [vmem:[#allocation11 + $0x1c] sm:$0xf]
        %v513 = vld [vmem:[#allocation11 + $0x20] sm:$0xf]
        %v514 = vld [vmem:[#allocation11 + $0x24] sm:$0xf]
        %v515 = vld [vmem:[#allocation11 + $0x28] sm:$0xf]
        %v516 = vld [vmem:[#allocation11 + $0x2c] sm:$0xf]
        %v517 = vld [vmem:[#allocation13] sm:$0x1]
        %v518 = vld [vmem:[#allocation14] sm:$0xf]
        %v519 = vld [vmem:[#allocation14 + $0x4] sm:$0xf]
        %v520 = vld [vmem:[#allocation14 + $0x8] sm:$0xf]
        %v521 = vld [vmem:[#allocation14 + $0xc] sm:$0xf]
        %v522 = vld [vmem:[#allocation14 + $0x10] sm:$0xf]
        %v523 = vld [vmem:[#allocation14 + $0x14] sm:$0xf]
        %v524 = vld [vmem:[#allocation14 + $0x18] sm:$0xf]
        %v525 = vld [vmem:[#allocation14 + $0x1c] sm:$0xf]
        %v526 = vld [vmem:[#allocation14 + $0x20] sm:$0xf]
        %v527 = vld [vmem:[#allocation14 + $0x24] sm:$0xf]
        %v528 = vld [vmem:[#allocation14 + $0x28] sm:$0xf]
        %v529 = vld [vmem:[#allocation14 + $0x2c] sm:$0xf]
        %v530 = vld [vmem:[#allocation16] sm:$0x1]
        %v531 = vld [vmem:[%s417] sm:$0xf]
        %v532 = vld [vmem:[%s417 + $0x4] sm:$0xf]
        %v533 = vld [vmem:[%s417 + $0x8] sm:$0xf]
        %v534 = vld [vmem:[%s417 + $0xc] sm:$0xf]
        %v535 = vld [vmem:[%s417 + $0x10] sm:$0xf]
        %v536 = vld [vmem:[%s417 + $0x14] sm:$0xf]
        %v537 = vld [vmem:[%s417 + $0x18] sm:$0xf]
        %v538 = vld [vmem:[%s417 + $0x1c] sm:$0xf]
        %v539 = vld [vmem:[%s417 + $0x20] sm:$0xf]
        %v540 = vld [vmem:[%s417 + $0x24] sm:$0xf]
        %v541 = vld [vmem:[%s417 + $0x28] sm:$0xf]
        %v542 = vld [vmem:[%s417 + $0x2c] sm:$0xf]
        %v543 = vld [vmem:[%s417 + $0x30] sm:$0xf]
        %v544 = vld [vmem:[%s417 + $0x34] sm:$0xf]
        %v545 = vld [vmem:[%s417 + $0x38] sm:$0xf]
        %v546 = vld [vmem:[%s417 + $0x3c] sm:$0xf]
        %s547 = scalar_lea.vmem %s417, 64 [#allocation2]
        %v548 = vld [vmem:[%s547] sm:$0xf]
        %v549 = vld [vmem:[%s547 + $0x4] sm:$0xf]
        %v550 = vld [vmem:[%s547 + $0x8] sm:$0xf]
        %v551 = vld [vmem:[%s547 + $0xc] sm:$0xf]
        %v552 = vld [vmem:[%s547 + $0x10] sm:$0xf]
        %v553 = vld [vmem:[%s547 + $0x14] sm:$0xf]
        %v554 = vld [vmem:[%s547 + $0x18] sm:$0xf]
        %v555 = vld [vmem:[%s547 + $0x1c] sm:$0xf]
        %v556 = vld [vmem:[%s547 + $0x20] sm:$0xf]
        %v557 = vld [vmem:[%s547 + $0x24] sm:$0xf]
        %v558 = vld [vmem:[%s547 + $0x28] sm:$0xf]
        %v559 = vld [vmem:[%s547 + $0x2c] sm:$0xf]
        %v560 = vld [vmem:[%s547 + $0x30] sm:$0xf]
        %v561 = vld [vmem:[%s547 + $0x34] sm:$0xf]
        %v562 = vld [vmem:[%s547 + $0x38] sm:$0xf]
        %v563 = vld [vmem:[%s547 + $0x3c] sm:$0xf]
        %s564 = scalar_lea.vmem %s417, 128 [#allocation2]
        %v565 = vld [vmem:[%s564] sm:$0xf]
        %v566 = vld [vmem:[%s564 + $0x4] sm:$0xf]
        %v567 = vld [vmem:[%s564 + $0x8] sm:$0xf]
        %v568 = vld [vmem:[%s564 + $0xc] sm:$0xf]
        %v569 = vld [vmem:[%s564 + $0x10] sm:$0xf]
        %v570 = vld [vmem:[%s564 + $0x14] sm:$0xf]
        %v571 = vld [vmem:[%s564 + $0x18] sm:$0xf]
        %v572 = vld [vmem:[%s564 + $0x1c] sm:$0xf]
        %v573 = vld [vmem:[%s564 + $0x20] sm:$0xf]
        %v574 = vld [vmem:[%s564 + $0x24] sm:$0xf]
        %v575 = vld [vmem:[%s564 + $0x28] sm:$0xf]
        %v576 = vld [vmem:[%s564 + $0x2c] sm:$0xf]
        %v577 = vld [vmem:[%s564 + $0x30] sm:$0xf]
        %v578 = vld [vmem:[%s564 + $0x34] sm:$0xf]
        %v579 = vld [vmem:[%s564 + $0x38] sm:$0xf]
        %v580 = vld [vmem:[%s564 + $0x3c] sm:$0xf]
        %s581 = scalar_lea.vmem %s417, 192 [#allocation2]
        %v582 = vld [vmem:[%s581] sm:$0xf]
        %v583 = vld [vmem:[%s581 + $0x4] sm:$0xf]
        %v584 = vld [vmem:[%s581 + $0x8] sm:$0xf]
        %v585 = vld [vmem:[%s581 + $0xc] sm:$0xf]
        %v586 = vld [vmem:[%s581 + $0x10] sm:$0xf]
        %v587 = vld [vmem:[%s581 + $0x14] sm:$0xf]
        %v588 = vld [vmem:[%s581 + $0x18] sm:$0xf]
        %v589 = vld [vmem:[%s581 + $0x1c] sm:$0xf]
        %v590 = vld [vmem:[%s581 + $0x20] sm:$0xf]
        %v591 = vld [vmem:[%s581 + $0x24] sm:$0xf]
        %v592 = vld [vmem:[%s581 + $0x28] sm:$0xf]
        %v593 = vld [vmem:[%s581 + $0x2c] sm:$0xf]
        %v594 = vld [vmem:[%s581 + $0x30] sm:$0xf]
        %v595 = vld [vmem:[%s581 + $0x34] sm:$0xf]
        %v596 = vld [vmem:[%s581 + $0x38] sm:$0xf]
        %v597 = vld [vmem:[%s581 + $0x3c] sm:$0xf]
        %v630 = vunpack.c.l.b16 %v531
        %v631 = vunpack.c.l.b16 %v532
        %v632 = vunpack.c.l.b16 %v533
        %v633 = vunpack.c.l.b16 %v534
        %v634 = vunpack.c.l.b16 %v535
        %v635 = vunpack.c.l.b16 %v536
        %v636 = vunpack.c.l.b16 %v537
        %v637 = vunpack.c.l.b16 %v538
        %v638 = vunpack.c.l.b16 %v539
        %v639 = vunpack.c.l.b16 %v540
        %v640 = vunpack.c.l.b16 %v541
        %v641 = vunpack.c.l.b16 %v542
        %v642 = vunpack.c.l.b16 %v543
        %v643 = vunpack.c.l.b16 %v544
        %v644 = vunpack.c.l.b16 %v545
        %v645 = vunpack.c.l.b16 %v546
        %v646 = vunpack.c.l.b16 %v565
        %v647 = vunpack.c.l.b16 %v566
        %v648 = vunpack.c.l.b16 %v567
        %v649 = vunpack.c.l.b16 %v568
        %v650 = vunpack.c.l.b16 %v569
        %v651 = vunpack.c.l.b16 %v570
        %v652 = vunpack.c.l.b16 %v571
        %v653 = vunpack.c.l.b16 %v572
        %v654 = vunpack.c.l.b16 %v573
        %v655 = vunpack.c.l.b16 %v574
        %v656 = vunpack.c.l.b16 %v575
        %v657 = vunpack.c.l.b16 %v576
        %v658 = vunpack.c.l.b16 %v577
        %v659 = vunpack.c.l.b16 %v578
        %v660 = vunpack.c.l.b16 %v579
        %v661 = vunpack.c.l.b16 %v580
        %v662 = vpack.c.b16 %v631, %v630
        %v663 = vpack.c.b16 %v633, %v632
        %v664 = vpack.c.b16 %v635, %v634
        %v665 = vpack.c.b16 %v637, %v636
        %v666 = vpack.c.b16 %v639, %v638
        %v667 = vpack.c.b16 %v641, %v640
        %v668 = vpack.c.b16 %v643, %v642
        %v669 = vpack.c.b16 %v645, %v644
        %v670 = vpack.c.b16 %v647, %v646
        %v671 = vpack.c.b16 %v649, %v648
        %v672 = vpack.c.b16 %v651, %v650
        %v673 = vpack.c.b16 %v653, %v652
        %v674 = vpack.c.b16 %v655, %v654
        %v675 = vpack.c.b16 %v657, %v656
        %v676 = vpack.c.b16 %v659, %v658
        %v677 = vpack.c.b16 %v661, %v660
        %v686 = vunpack.c.l.b16 %v487
        %v687 = vunpack.c.l.b16 %v488
        %v688 = vunpack.c.l.b16 %v489
        %v689 = vunpack.c.l.b16 %v490
        %v690 = vunpack.c.l.b16 %v491
        %v691 = vunpack.c.l.b16 %v492
        %v692 = vunpack.c.l.b16 %v493
        %v693 = vunpack.c.l.b16 %v494
        %v694 = vpack.c.b16 %v687, %v686
        %v695 = vpack.c.b16 %v689, %v688
        %v696 = vpack.c.b16 %v691, %v690
        %v697 = vpack.c.b16 %v693, %v692
        %vm702 = vcmask 523264
        %v704 = vsel %vm702, %v662, 0
        %v707 = vsel %vm702, %v663, 0
        %v710 = vsel %vm702, %v664, 0
        %v713 = vsel %vm702, %v665, 0
        %v716 = vsel %vm702, %v666, 0
        %v719 = vsel %vm702, %v667, 0
        %v722 = vsel %vm702, %v668, 0
        %v725 = vsel %vm702, %v669, 0
        %v728 = vsel %vm702, %v670, 0
        %v731 = vsel %vm702, %v671, 0
        %v734 = vsel %vm702, %v672, 0
        %v737 = vsel %vm702, %v673, 0
        %v740 = vsel %vm702, %v674, 0
        %v743 = vsel %vm702, %v675, 0
        %v746 = vsel %vm702, %v676, 0
        %v749 = vsel %vm702, %v677, 0
        %751 = vmatprep.subr.bf16.mxu0 0
        %752 = vmatpush1.bf16.msra.mxu0 %v694
        %753 = vmatprep.subr.bf16.mxu0 0
        %754 = vmatpush1.bf16.msra.mxu0 %v695
        %755 = vmatprep.subr.bf16.mxu0 0
        %756 = vmatpush1.bf16.msra.mxu0 %v696
        %757 = vmatprep.subr.bf16.mxu0 0
        %758 = vmatpush1.bf16.msra.mxu0 %v697
        %759 = vmatprep.subr.bf16.mxu0 0
        %760 = vmatpush1.bf16.msra.mxu0 0
        %761 = vmatprep.subr.bf16.mxu0 0
        %762 = vmatpush1.bf16.msra.mxu0 0
        %763 = vmatprep.subr.bf16.mxu0 0
        %764 = vmatpush1.bf16.msra.mxu0 0
        %765 = vmatprep.subr.bf16.mxu0 0
        %766 = vmatpush1.bf16.msra.mxu0 0
        %767 = vmatprep.subr.bf16.mxu0 0
        %768 = vmatpush1.bf16.msra.mxu0 0
        %769 = vmatprep.subr.bf16.mxu0 0
        %770 = vmatpush1.bf16.msra.mxu0 0
        %771 = vmatprep.subr.bf16.mxu0 0
        %772 = vmatpush1.bf16.msra.mxu0 0
        %773 = vmatprep.subr.bf16.mxu0 0
        %774 = vmatpush1.bf16.msra.mxu0 0
        %775 = vmatprep.subr.bf16.mxu0 0
        %776 = vmatpush1.bf16.msra.mxu0 0
        %777 = vmatprep.subr.bf16.mxu0 0
        %778 = vmatpush1.bf16.msra.mxu0 0
        %779 = vmatprep.subr.bf16.mxu0 0
        %780 = vmatpush1.bf16.msra.mxu0 0
        %781 = vmatprep.subr.bf16.mxu0 0
        %782 = vmatpush1.bf16.msra.mxu0 0
        %783 = vmatprep.mubr.bf16.mxu0 0
        %784 = vmatmul.mubr.bf16.gmra.mrb[0].mxu0 %v704
        %v785 = vpop.f32.mrb[0].mxu0
        %v786 = vadd.f32 0.0, %v785
        %v787 = vpop.f32.mrb[0].mxu0
        %v788 = vpop.f32.mrb[0].mxu0
        %v789 = vadd.f32 0.0, %v788
        %v790 = vpop.f32.mrb[0].mxu0
        %791 = vmatprep.mubr.bf16.mxu0 0
        %792 = vmatmul.mubr.bf16.gmra.mrb[0].mxu0 %v707
        %v793 = vpop.f32.mrb[0].mxu0
        %v794 = vadd.f32 0.0, %v793
        %v795 = vpop.f32.mrb[0].mxu0
        %v796 = vpop.f32.mrb[0].mxu0
        %v797 = vadd.f32 0.0, %v796
        %v798 = vpop.f32.mrb[0].mxu0
        %799 = vmatprep.mubr.bf16.mxu0 0
        %800 = vmatmul.mubr.bf16.gmra.mrb[0].mxu0 %v710
        %v801 = vpop.f32.mrb[0].mxu0
        %v802 = vadd.f32 0.0, %v801
        %v803 = vpop.f32.mrb[0].mxu0
        %v804 = vpop.f32.mrb[0].mxu0
        %v805 = vadd.f32 0.0, %v804
        %v806 = vpop.f32.mrb[0].mxu0
        %807 = vmatprep.mubr.bf16.mxu0 0
        %808 = vmatmul.mubr.bf16.gmra.mrb[0].mxu0 %v713
        %v809 = vpop.f32.mrb[0].mxu0
        %v810 = vadd.f32 0.0, %v809
        %v811 = vpop.f32.mrb[0].mxu0
        %v812 = vpop.f32.mrb[0].mxu0
        %v813 = vadd.f32 0.0, %v812
        %v814 = vpop.f32.mrb[0].mxu0
        %815 = vmatprep.mubr.bf16.mxu0 0
        %816 = vmatmul.mubr.bf16.gmra.mrb[0].mxu0 %v716
        %v817 = vpop.f32.mrb[0].mxu0
        %v818 = vadd.f32 0.0, %v817
        %v819 = vpop.f32.mrb[0].mxu0
        %v820 = vpop.f32.mrb[0].mxu0
        %v821 = vadd.f32 0.0, %v820
        %v822 = vpop.f32.mrb[0].mxu0
        %823 = vmatprep.mubr.bf16.mxu0 0
        %824 = vmatmul.mubr.bf16.gmra.mrb[0].mxu0 %v719
        %v825 = vpop.f32.mrb[0].mxu0
        %v826 = vadd.f32 0.0, %v825
        %v827 = vpop.f32.mrb[0].mxu0
        %v828 = vpop.f32.mrb[0].mxu0
        %v829 = vadd.f32 0.0, %v828
        %v830 = vpop.f32.mrb[0].mxu0
        %831 = vmatprep.mubr.bf16.mxu0 0
        %832 = vmatmul.mubr.bf16.gmra.mrb[0].mxu0 %v722
        %v833 = vpop.f32.mrb[0].mxu0
        %v834 = vadd.f32 0.0, %v833
        %v835 = vpop.f32.mrb[0].mxu0
        %v836 = vpop.f32.mrb[0].mxu0
        %v837 = vadd.f32 0.0, %v836
        %v838 = vpop.f32.mrb[0].mxu0
        %839 = vmatprep.mubr.bf16.mxu0 0
        %840 = vmatmul.mubr.bf16.gmra.mrb[0].mxu0 %v725
        %v841 = vpop.f32.mrb[0].mxu0
        %v842 = vadd.f32 0.0, %v841
        %v843 = vpop.f32.mrb[0].mxu0
        %v844 = vpop.f32.mrb[0].mxu0
        %v845 = vadd.f32 0.0, %v844
        %v846 = vpop.f32.mrb[0].mxu0
        %847 = vmatprep.mubr.bf16.mxu0 0
        %848 = vmatmul.mubr.bf16.gmra.mrb[0].mxu0 %v728
        %v849 = vpop.f32.mrb[0].mxu0
        %v850 = vadd.f32 0.0, %v849
        %v851 = vpop.f32.mrb[0].mxu0
        %v852 = vpop.f32.mrb[0].mxu0
        %v853 = vadd.f32 0.0, %v852
        %v854 = vpop.f32.mrb[0].mxu0
        %855 = vmatprep.mubr.bf16.mxu0 0
        %856 = vmatmul.mubr.bf16.gmra.mrb[0].mxu0 %v731
        %v857 = vpop.f32.mrb[0].mxu0
        %v858 = vadd.f32 0.0, %v857
        %v859 = vpop.f32.mrb[0].mxu0
        %v860 = vpop.f32.mrb[0].mxu0
        %v861 = vadd.f32 0.0, %v860
        %v862 = vpop.f32.mrb[0].mxu0
        %863 = vmatprep.mubr.bf16.mxu0 0
        %864 = vmatmul.mubr.bf16.gmra.mrb[0].mxu0 %v734
        %v865 = vpop.f32.mrb[0].mxu0
        %v866 = vadd.f32 0.0, %v865
        %v867 = vpop.f32.mrb[0].mxu0
        %v868 = vpop.f32.mrb[0].mxu0
        %v869 = vadd.f32 0.0, %v868
        %v870 = vpop.f32.mrb[0].mxu0
        %871 = vmatprep.mubr.bf16.mxu0 0
        %872 = vmatmul.mubr.bf16.gmra.mrb[0].mxu0 %v737
        %v873 = vpop.f32.mrb[0].mxu0
        %v874 = vadd.f32 0.0, %v873
        %v875 = vpop.f32.mrb[0].mxu0
        %v876 = vpop.f32.mrb[0].mxu0
        %v877 = vadd.f32 0.0, %v876
        %v878 = vpop.f32.mrb[0].mxu0
        %879 = vmatprep.mubr.bf16.mxu0 0
        %880 = vmatmul.mubr.bf16.gmra.mrb[0].mxu0 %v740
        %v881 = vpop.f32.mrb[0].mxu0
        %v882 = vadd.f32 0.0, %v881
        %v883 = vpop.f32.mrb[0].mxu0
        %v884 = vpop.f32.mrb[0].mxu0
        %v885 = vadd.f32 0.0, %v884
        %v886 = vpop.f32.mrb[0].mxu0
        %887 = vmatprep.mubr.bf16.mxu0 0
        %888 = vmatmul.mubr.bf16.gmra.mrb[0].mxu0 %v743
        %v889 = vpop.f32.mrb[0].mxu0
        %v890 = vadd.f32 0.0, %v889
        %v891 = vpop.f32.mrb[0].mxu0
        %v892 = vpop.f32.mrb[0].mxu0
        %v893 = vadd.f32 0.0, %v892
        %v894 = vpop.f32.mrb[0].mxu0
        %895 = vmatprep.mubr.bf16.mxu0 0
        %896 = vmatmul.mubr.bf16.gmra.mrb[0].mxu0 %v746
        %v897 = vpop.f32.mrb[0].mxu0
        %v898 = vadd.f32 0.0, %v897
        %v899 = vpop.f32.mrb[0].mxu0
        %v900 = vpop.f32.mrb[0].mxu0
        %v901 = vadd.f32 0.0, %v900
        %v902 = vpop.f32.mrb[0].mxu0
        %903 = vmatprep.mubr.bf16.mxu0 0
        %904 = vmatmul.mubr.bf16.gmra.mrb[0].mxu0 %v749
        %v905 = vpop.f32.mrb[0].mxu0
        %v906 = vadd.f32 0.0, %v905
        %v907 = vpop.f32.mrb[0].mxu0
        %v908 = vpop.f32.mrb[0].mxu0
        %v909 = vadd.f32 0.0, %v908
        %v910 = vpop.f32.mrb[0].mxu0
        %911 = vdwg.mxu0
        %v913 = vlaneseq
        %v914 = vshrl.u32 %v913, 7
        %v915 = vsub.s32 0, %v914
        %v916 = vrot.slane %v495, %v915
        %v918 = vadd.f32 %v786, %v916
        %v919 = vadd.f32 %v789, %v916
        %v920 = vadd.f32 %v794, %v916
        %v921 = vadd.f32 %v797, %v916
        %v922 = vadd.f32 %v802, %v916
        %v923 = vadd.f32 %v805, %v916
        %v924 = vadd.f32 %v810, %v916
        %v925 = vadd.f32 %v813, %v916
        %v926 = vadd.f32 %v818, %v916
        %v927 = vadd.f32 %v821, %v916
        %v928 = vadd.f32 %v826, %v916
        %v929 = vadd.f32 %v829, %v916
        %v930 = vadd.f32 %v834, %v916
        %v931 = vadd.f32 %v837, %v916
        %v932 = vadd.f32 %v842, %v916
        %v933 = vadd.f32 %v845, %v916
        %v934 = vadd.f32 %v850, %v916
        %v935 = vadd.f32 %v853, %v916
        %v936 = vadd.f32 %v858, %v916
        %v937 = vadd.f32 %v861, %v916
        %v938 = vadd.f32 %v866, %v916
        %v939 = vadd.f32 %v869, %v916
        %v940 = vadd.f32 %v874, %v916
        %v941 = vadd.f32 %v877, %v916
        %v942 = vadd.f32 %v882, %v916
        %v943 = vadd.f32 %v885, %v916
        %v944 = vadd.f32 %v890, %v916
        %v945 = vadd.f32 %v893, %v916
        %v946 = vadd.f32 %v898, %v916
        %v947 = vadd.f32 %v901, %v916
        %v948 = vadd.f32 %v906, %v916
        %v949 = vadd.f32 %v909, %v916
        %v950 = vmax.f32 %v918, 0.0
        %v951 = vmax.f32 %v919, 0.0
        %v952 = vmax.f32 %v920, 0.0
        %v953 = vmax.f32 %v921, 0.0
        %v954 = vmax.f32 %v922, 0.0
        %v955 = vmax.f32 %v923, 0.0
        %v956 = vmax.f32 %v924, 0.0
        %v957 = vmax.f32 %v925, 0.0
        %v958 = vmax.f32 %v926, 0.0
        %v959 = vmax.f32 %v927, 0.0
        %v960 = vmax.f32 %v928, 0.0
        %v961 = vmax.f32 %v929, 0.0
        %v962 = vmax.f32 %v930, 0.0
        %v963 = vmax.f32 %v931, 0.0
        %v964 = vmax.f32 %v932, 0.0
        %v965 = vmax.f32 %v933, 0.0
        %v966 = vmax.f32 %v934, 0.0
        %v967 = vmax.f32 %v935, 0.0
        %v968 = vmax.f32 %v936, 0.0
        %v969 = vmax.f32 %v937, 0.0
        %v970 = vmax.f32 %v938, 0.0
        %v971 = vmax.f32 %v939, 0.0
        %v972 = vmax.f32 %v940, 0.0
        %v973 = vmax.f32 %v941, 0.0
        %v974 = vmax.f32 %v942, 0.0
        %v975 = vmax.f32 %v943, 0.0
        %v976 = vmax.f32 %v944, 0.0
        %v977 = vmax.f32 %v945, 0.0
        %v978 = vmax.f32 %v946, 0.0
        %v979 = vmax.f32 %v947, 0.0
        %v980 = vmax.f32 %v948, 0.0
        %v981 = vmax.f32 %v949, 0.0
        %v982 = vmax.f32 %v950, %v966
        %v983 = vmax.f32 %v951, %v967
        %v984 = vmax.f32 %v952, %v968
        %v985 = vmax.f32 %v953, %v969
        %v986 = vmax.f32 %v954, %v970
        %v987 = vmax.f32 %v955, %v971
        %v988 = vmax.f32 %v956, %v972
        %v989 = vmax.f32 %v957, %v973
        %v990 = vmax.f32 %v958, %v974
        %v991 = vmax.f32 %v959, %v975
        %v992 = vmax.f32 %v960, %v976
        %v993 = vmax.f32 %v961, %v977
        %v994 = vmax.f32 %v962, %v978
        %v995 = vmax.f32 %v963, %v979
        %v996 = vmax.f32 %v964, %v980
        %v997 = vmax.f32 %v965, %v981
        %v998 = vmax.f32 %v982, 0.0
        %v999 = vmax.f32 %v983, 0.0
        %v1000 = vmax.f32 %v984, 0.0
        %v1001 = vmax.f32 %v985, 0.0
        %v1002 = vmax.f32 %v986, %v966
        %v1003 = vmax.f32 %v987, %v967
        %v1004 = vmax.f32 %v988, %v968
        %v1005 = vmax.f32 %v989, %v969
        %v1006 = vmax.f32 %v990, %v970
        %v1007 = vmax.f32 %v991, %v971
        %v1008 = vmax.f32 %v992, %v972
        %v1009 = vmax.f32 %v993, %v973
        %v1010 = vmax.f32 %v994, %v974
        %v1011 = vmax.f32 %v995, %v975
        %v1012 = vmax.f32 %v996, %v976
        %v1013 = vmax.f32 %v997, %v977
        %v1026 = vunpack.c.l.b16 %v582
        %v1027 = vunpack.c.l.b16 %v583
        %v1028 = vunpack.c.l.b16 %v584
        %v1029 = vunpack.c.l.b16 %v585
        %v1030 = vunpack.c.l.b16 %v586
        %v1031 = vunpack.c.l.b16 %v587
        %v1032 = vunpack.c.l.b16 %v588
        %v1033 = vunpack.c.l.b16 %v589
        %v1034 = vunpack.c.l.b16 %v590
        %v1035 = vunpack.c.l.b16 %v591
        %v1036 = vunpack.c.l.b16 %v592
        %v1037 = vunpack.c.l.b16 %v593
        %v1038 = vpack.c.b16 %v1027, %v1026
        %v1039 = vpack.c.b16 %v1029, %v1028
        %v1040 = vpack.c.b16 %v1031, %v1030
        %v1041 = vpack.c.b16 %v1033, %v1032
        %v1042 = vpack.c.b16 %v1035, %v1034
        %v1043 = vpack.c.b16 %v1037, %v1036
        %v1058 = vmax.bf16 %v1038, %v664
        %v1059 = vmax.bf16 %v1039, %v665
        %v1060 = vmax.bf16 %v1040, %v666
        %v1061 = vmax.bf16 %v1041, %v667
        %v1062 = vmax.bf16 %v1042, %v668
        %v1063 = vmax.bf16 %v1043, %v669
        %v1080 = vunpack.c.l.b16 %v548
        %v1081 = vunpack.c.l.b16 %v549
        %v1082 = vunpack.c.l.b16 %v550
        %v1083 = vunpack.c.l.b16 %v551
        %v1084 = vunpack.c.l.b16 %v552
        %v1085 = vunpack.c.l.b16 %v553
        %v1086 = vunpack.c.l.b16 %v554
        %v1087 = vunpack.c.l.b16 %v555
        %v1088 = vunpack.c.l.b16 %v556
        %v1089 = vunpack.c.l.b16 %v557
        %v1090 = vunpack.c.l.b16 %v558
        %v1091 = vunpack.c.l.b16 %v559
        %v1092 = vunpack.c.l.b16 %v560
        %v1093 = vunpack.c.l.b16 %v561
        %v1094 = vunpack.c.l.b16 %v562
        %v1095 = vunpack.c.l.b16 %v563
        %v1096 = vpack.c.b16 %v1081, %v1080
        %v1097 = vpack.c.b16 %v1083, %v1082
        %v1098 = vpack.c.b16 %v1085, %v1084
        %v1099 = vpack.c.b16 %v1087, %v1086
        %v1100 = vpack.c.b16 %v1089, %v1088
        %v1101 = vpack.c.b16 %v1091, %v1090
        %v1102 = vpack.c.b16 %v1093, %v1092
        %v1103 = vpack.c.b16 %v1095, %v1094
        %v1112 = vmax.bf16 %v662, %v1096
        %v1113 = vmax.bf16 %v663, %v1097
        %v1114 = vmax.bf16 %v1058, %v1098
        %v1115 = vmax.bf16 %v1059, %v1099
        %v1116 = vmax.bf16 %v1060, %v1100
        %v1117 = vmax.bf16 %v1061, %v1101
        %v1118 = vmax.bf16 %v1062, %v1102
        %v1119 = vmax.bf16 %v1063, %v1103
        %v1120 = vmax.bf16 %v548, %v565
        %v1121 = vmax.bf16 %v549, %v566
        %v1122 = vmax.bf16 %v550, %v567
        %v1123 = vmax.bf16 %v551, %v568
        %v1124 = vmax.bf16 %v552, %v569
        %v1125 = vmax.bf16 %v553, %v570
        %v1126 = vmax.bf16 %v554, %v571
        %v1127 = vmax.bf16 %v555, %v572
        %v1128 = vmax.bf16 %v556, %v573
        %v1129 = vmax.bf16 %v557, %v574
        %v1130 = vmax.bf16 %v558, %v575
        %v1131 = vmax.bf16 %v559, %v576
        %v1132 = vmax.bf16 %v560, %v577
        %v1133 = vmax.bf16 %v561, %v578
        %v1134 = vmax.bf16 %v562, %v579
        %v1135 = vmax.bf16 %v563, %v580
        %v1136 = vmax.bf16 %v1120, %v582
        %v1137 = vmax.bf16 %v1121, %v583
        %v1138 = vmax.bf16 %v1122, %v584
        %v1139 = vmax.bf16 %v1123, %v585
        %v1140 = vmax.bf16 %v1124, %v586
        %v1141 = vmax.bf16 %v1125, %v587
        %v1142 = vmax.bf16 %v1126, %v588
        %v1143 = vmax.bf16 %v1127, %v589
        %v1144 = vmax.bf16 %v1128, %v590
        %v1145 = vmax.bf16 %v1129, %v591
        %v1146 = vmax.bf16 %v1130, %v592
        %v1147 = vmax.bf16 %v1131, %v593
        %v1148 = vmax.bf16 %v1132, %v594
        %v1149 = vmax.bf16 %v1133, %v595
        %v1150 = vmax.bf16 %v1134, %v596
        %v1151 = vmax.bf16 %v1135, %v597
        %v1168 = vunpack.c.l.b16 %v1136
        %v1169 = vunpack.c.l.b16 %v1137
        %v1170 = vunpack.c.l.b16 %v1138
        %v1171 = vunpack.c.l.b16 %v1139
        %v1172 = vunpack.c.l.b16 %v1140
        %v1173 = vunpack.c.l.b16 %v1141
        %v1174 = vunpack.c.l.b16 %v1142
        %v1175 = vunpack.c.l.b16 %v1143
        %v1176 = vunpack.c.l.b16 %v1144
        %v1177 = vunpack.c.l.b16 %v1145
        %v1178 = vunpack.c.l.b16 %v1146
        %v1179 = vunpack.c.l.b16 %v1147
        %v1180 = vunpack.c.l.b16 %v1148
        %v1181 = vunpack.c.l.b16 %v1149
        %v1182 = vunpack.c.l.b16 %v1150
        %v1183 = vunpack.c.l.b16 %v1151
        %v1184 = vpack.c.b16 %v1169, %v1168
        %v1185 = vpack.c.b16 %v1171, %v1170
        %v1186 = vpack.c.b16 %v1173, %v1172
        %v1187 = vpack.c.b16 %v1175, %v1174
        %v1188 = vpack.c.b16 %v1177, %v1176
        %v1189 = vpack.c.b16 %v1179, %v1178
        %v1190 = vpack.c.b16 %v1181, %v1180
        %v1191 = vpack.c.b16 %v1183, %v1182
        %v1200 = vunpack.c.l.b16 %v496
        %v1201 = vunpack.c.l.b16 %v497
        %v1202 = vunpack.c.l.b16 %v498
        %v1203 = vunpack.c.l.b16 %v499
        %v1204 = vunpack.c.l.b16 %v500
        %v1205 = vunpack.c.l.b16 %v501
        %v1206 = vunpack.c.l.b16 %v502
        %v1207 = vunpack.c.l.b16 %v503
        %v1208 = vpack.c.b16 %v1201, %v1200
        %v1209 = vpack.c.b16 %v1203, %v1202
        %v1210 = vpack.c.b16 %v1205, %v1204
        %v1211 = vpack.c.b16 %v1207, %v1206
        %v1217 = vsel %vm702, %v1112, 0
        %v1220 = vsel %vm702, %v1113, 0
        %v1223 = vsel %vm702, %v1114, 0
        %v1226 = vsel %vm702, %v1115, 0
        %v1229 = vsel %vm702, %v1116, 0
        %v1232 = vsel %vm702, %v1117, 0
        %v1235 = vsel %vm702, %v1118, 0
        %v1238 = vsel %vm702, %v1119, 0
        %v1241 = vsel %vm702, %v1184, 0
        %v1244 = vsel %vm702, %v1185, 0
        %v1247 = vsel %vm702, %v1186, 0
        %v1250 = vsel %vm702, %v1187, 0
        %v1253 = vsel %vm702, %v1188, 0
        %v1256 = vsel %vm702, %v1189, 0
        %v1259 = vsel %vm702, %v1190, 0
        %v1262 = vsel %vm702, %v1191, 0
        %1264 = vmatprep.subr.bf16.mxu0 0
        %1265 = vmatpush1.bf16.msra.mxu0 %v1208
        %1266 = vmatprep.subr.bf16.mxu0 0
        %1267 = vmatpush1.bf16.msra.mxu0 %v1209
        %1268 = vmatprep.subr.bf16.mxu0 0
        %1269 = vmatpush1.bf16.msra.mxu0 %v1210
        %1270 = vmatprep.subr.bf16.mxu0 0
        %1271 = vmatpush1.bf16.msra.mxu0 %v1211
        %1272 = vmatprep.subr.bf16.mxu0 0
        %1273 = vmatpush1.bf16.msra.mxu0 0
        %1274 = vmatprep.subr.bf16.mxu0 0
        %1275 = vmatpush1.bf16.msra.mxu0 0
        %1276 = vmatprep.subr.bf16.mxu0 0
        %1277 = vmatpush1.bf16.msra.mxu0 0
        %1278 = vmatprep.subr.bf16.mxu0 0
        %1279 = vmatpush1.bf16.msra.mxu0 0
        %1280 = vmatprep.subr.bf16.mxu0 0
        %1281 = vmatpush1.bf16.msra.mxu0 0
        %1282 = vmatprep.subr.bf16.mxu0 0
        %1283 = vmatpush1.bf16.msra.mxu0 0
        %1284 = vmatprep.subr.bf16.mxu0 0
        %1285 = vmatpush1.bf16.msra.mxu0 0
        %1286 = vmatprep.subr.bf16.mxu0 0
        %1287 = vmatpush1.bf16.msra.mxu0 0
        %1288 = vmatprep.subr.bf16.mxu0 0
        %1289 = vmatpush1.bf16.msra.mxu0 0
        %1290 = vmatprep.subr.bf16.mxu0 0
        %1291 = vmatpush1.bf16.msra.mxu0 0
        %1292 = vmatprep.subr.bf16.mxu0 0
        %1293 = vmatpush1.bf16.msra.mxu0 0
        %1294 = vmatprep.subr.bf16.mxu0 0
        %1295 = vmatpush1.bf16.msra.mxu0 0
        %1296 = vmatprep.mubr.bf16.mxu0 0
        %1297 = vmatmul.mubr.bf16.gmra.mrb[0].mxu0 %v1217
        %v1298 = vpop.f32.mrb[0].mxu0
        %v1299 = vadd.f32 0.0, %v1298
        %v1300 = vpop.f32.mrb[0].mxu0
        %v1301 = vpop.f32.mrb[0].mxu0
        %v1302 = vadd.f32 0.0, %v1301
        %v1303 = vpop.f32.mrb[0].mxu0
        %1304 = vmatprep.mubr.bf16.mxu0 0
        %1305 = vmatmul.mubr.bf16.gmra.mrb[0].mxu0 %v1220
        %v1306 = vpop.f32.mrb[0].mxu0
        %v1307 = vadd.f32 0.0, %v1306
        %v1308 = vpop.f32.mrb[0].mxu0
        %v1309 = vpop.f32.mrb[0].mxu0
        %v1310 = vadd.f32 0.0, %v1309
        %v1311 = vpop.f32.mrb[0].mxu0
        %1312 = vmatprep.mubr.bf16.mxu0 0
        %1313 = vmatmul.mubr.bf16.gmra.mrb[0].mxu0 %v1223
        %v1314 = vpop.f32.mrb[0].mxu0
        %v1315 = vadd.f32 0.0, %v1314
        %v1316 = vpop.f32.mrb[0].mxu0
        %v1317 = vpop.f32.mrb[0].mxu0
        %v1318 = vadd.f32 0.0, %v1317
        %v1319 = vpop.f32.mrb[0].mxu0
        %1320 = vmatprep.mubr.bf16.mxu0 0
        %1321 = vmatmul.mubr.bf16.gmra.mrb[0].mxu0 %v1226
        %v1322 = vpop.f32.mrb[0].mxu0
        %v1323 = vadd.f32 0.0, %v1322
        %v1324 = vpop.f32.mrb[0].mxu0
        %v1325 = vpop.f32.mrb[0].mxu0
        %v1326 = vadd.f32 0.0, %v1325
        %v1327 = vpop.f32.mrb[0].mxu0
        %1328 = vmatprep.mubr.bf16.mxu0 0
        %1329 = vmatmul.mubr.bf16.gmra.mrb[0].mxu0 %v1229
        %v1330 = vpop.f32.mrb[0].mxu0
        %v1331 = vadd.f32 0.0, %v1330
        %v1332 = vpop.f32.mrb[0].mxu0
        %v1333 = vpop.f32.mrb[0].mxu0
        %v1334 = vadd.f32 0.0, %v1333
        %v1335 = vpop.f32.mrb[0].mxu0
        %1336 = vmatprep.mubr.bf16.mxu0 0
        %1337 = vmatmul.mubr.bf16.gmra.mrb[0].mxu0 %v1232
        %v1338 = vpop.f32.mrb[0].mxu0
        %v1339 = vadd.f32 0.0, %v1338
        %v1340 = vpop.f32.mrb[0].mxu0
        %v1341 = vpop.f32.mrb[0].mxu0
        %v1342 = vadd.f32 0.0, %v1341
        %v1343 = vpop.f32.mrb[0].mxu0
        %1344 = vmatprep.mubr.bf16.mxu0 0
        %1345 = vmatmul.mubr.bf16.gmra.mrb[0].mxu0 %v1235
        %v1346 = vpop.f32.mrb[0].mxu0
        %v1347 = vadd.f32 0.0, %v1346
        %v1348 = vpop.f32.mrb[0].mxu0
        %v1349 = vpop.f32.mrb[0].mxu0
        %v1350 = vadd.f32 0.0, %v1349
        %v1351 = vpop.f32.mrb[0].mxu0
        %1352 = vmatprep.mubr.bf16.mxu0 0
        %1353 = vmatmul.mubr.bf16.gmra.mrb[0].mxu0 %v1238
        %v1354 = vpop.f32.mrb[0].mxu0
        %v1355 = vadd.f32 0.0, %v1354
        %v1356 = vpop.f32.mrb[0].mxu0
        %v1357 = vpop.f32.mrb[0].mxu0
        %v1358 = vadd.f32 0.0, %v1357
        %v1359 = vpop.f32.mrb[0].mxu0
        %1360 = vmatprep.mubr.bf16.mxu0 0
        %1361 = vmatmul.mubr.bf16.gmra.mrb[0].mxu0 %v1241
        %v1362 = vpop.f32.mrb[0].mxu0
        %v1363 = vadd.f32 0.0, %v1362
        %v1364 = vpop.f32.mrb[0].mxu0
        %v1365 = vpop.f32.mrb[0].mxu0
        %v1366 = vadd.f32 0.0, %v1365
        %v1367 = vpop.f32.mrb[0].mxu0
        %1368 = vmatprep.mubr.bf16.mxu0 0
        %1369 = vmatmul.mubr.bf16.gmra.mrb[0].mxu0 %v1244
        %v1370 = vpop.f32.mrb[0].mxu0
        %v1371 = vadd.f32 0.0, %v1370
        %v1372 = vpop.f32.mrb[0].mxu0
        %v1373 = vpop.f32.mrb[0].mxu0
        %v1374 = vadd.f32 0.0, %v1373
        %v1375 = vpop.f32.mrb[0].mxu0
        %1376 = vmatprep.mubr.bf16.mxu0 0
        %1377 = vmatmul.mubr.bf16.gmra.mrb[0].mxu0 %v1247
        %v1378 = vpop.f32.mrb[0].mxu0
        %v1379 = vadd.f32 0.0, %v1378
        %v1380 = vpop.f32.mrb[0].mxu0
        %v1381 = vpop.f32.mrb[0].mxu0
        %v1382 = vadd.f32 0.0, %v1381
        %v1383 = vpop.f32.mrb[0].mxu0
        %1384 = vmatprep.mubr.bf16.mxu0 0
        %1385 = vmatmul.mubr.bf16.gmra.mrb[0].mxu0 %v1250
        %v1386 = vpop.f32.mrb[0].mxu0
        %v1387 = vadd.f32 0.0, %v1386
        %v1388 = vpop.f32.mrb[0].mxu0
        %v1389 = vpop.f32.mrb[0].mxu0
        %v1390 = vadd.f32 0.0, %v1389
        %v1391 = vpop.f32.mrb[0].mxu0
        %1392 = vmatprep.mubr.bf16.mxu0 0
        %1393 = vmatmul.mubr.bf16.gmra.mrb[0].mxu0 %v1253
        %v1394 = vpop.f32.mrb[0].mxu0
        %v1395 = vadd.f32 0.0, %v1394
        %v1396 = vpop.f32.mrb[0].mxu0
        %v1397 = vpop.f32.mrb[0].mxu0
        %v1398 = vadd.f32 0.0, %v1397
        %v1399 = vpop.f32.mrb[0].mxu0
        %1400 = vmatprep.mubr.bf16.mxu0 0
        %1401 = vmatmul.mubr.bf16.gmra.mrb[0].mxu0 %v1256
        %v1402 = vpop.f32.mrb[0].mxu0
        %v1403 = vadd.f32 0.0, %v1402
        %v1404 = vpop.f32.mrb[0].mxu0
        %v1405 = vpop.f32.mrb[0].mxu0
        %v1406 = vadd.f32 0.0, %v1405
        %v1407 = vpop.f32.mrb[0].mxu0
        %1408 = vmatprep.mubr.bf16.mxu0 0
        %1409 = vmatmul.mubr.bf16.gmra.mrb[0].mxu0 %v1259
        %v1410 = vpop.f32.mrb[0].mxu0
        %v1411 = vadd.f32 0.0, %v1410
        %v1412 = vpop.f32.mrb[0].mxu0
        %v1413 = vpop.f32.mrb[0].mxu0
        %v1414 = vadd.f32 0.0, %v1413
        %v1415 = vpop.f32.mrb[0].mxu0
        %1416 = vmatprep.mubr.bf16.mxu0 0
        %1417 = vmatmul.mubr.bf16.gmra.mrb[0].mxu0 %v1262
        %v1418 = vpop.f32.mrb[0].mxu0
        %v1419 = vadd.f32 0.0, %v1418
        %v1420 = vpop.f32.mrb[0].mxu0
        %v1421 = vpop.f32.mrb[0].mxu0
        %v1422 = vadd.f32 0.0, %v1421
        %v1423 = vpop.f32.mrb[0].mxu0
        %1424 = vdwg.mxu0
        %v1426 = vlaneseq
        %v1427 = vshrl.u32 %v1426, 7
        %v1428 = vsub.s32 0, %v1427
        %v1429 = vrot.slane %v504, %v1428
        %v1431 = vadd.f32 %v1299, %v1429
        %v1432 = vadd.f32 %v1302, %v1429
        %v1433 = vadd.f32 %v1307, %v1429
        %v1434 = vadd.f32 %v1310, %v1429
        %v1435 = vadd.f32 %v1315, %v1429
        %v1436 = vadd.f32 %v1318, %v1429
        %v1437 = vadd.f32 %v1323, %v1429
        %v1438 = vadd.f32 %v1326, %v1429
        %v1439 = vadd.f32 %v1331, %v1429
        %v1440 = vadd.f32 %v1334, %v1429
        %v1441 = vadd.f32 %v1339, %v1429
        %v1442 = vadd.f32 %v1342, %v1429
        %v1443 = vadd.f32 %v1347, %v1429
        %v1444 = vadd.f32 %v1350, %v1429
        %v1445 = vadd.f32 %v1355, %v1429
        %v1446 = vadd.f32 %v1358, %v1429
        %v1447 = vadd.f32 %v1363, %v1429
        %v1448 = vadd.f32 %v1366, %v1429
        %v1449 = vadd.f32 %v1371, %v1429
        %v1450 = vadd.f32 %v1374, %v1429
        %v1451 = vadd.f32 %v1379, %v1429
        %v1452 = vadd.f32 %v1382, %v1429
        %v1453 = vadd.f32 %v1387, %v1429
        %v1454 = vadd.f32 %v1390, %v1429
        %v1455 = vadd.f32 %v1395, %v1429
        %v1456 = vadd.f32 %v1398, %v1429
        %v1457 = vadd.f32 %v1403, %v1429
        %v1458 = vadd.f32 %v1406, %v1429
        %v1459 = vadd.f32 %v1411, %v1429
        %v1460 = vadd.f32 %v1414, %v1429
        %v1461 = vadd.f32 %v1419, %v1429
        %v1462 = vadd.f32 %v1422, %v1429
        %v1463 = vmax.f32 %v1431, 0.0
        %v1464 = vmax.f32 %v1432, 0.0
        %v1465 = vmax.f32 %v1433, 0.0
        %v1466 = vmax.f32 %v1434, 0.0
        %v1467 = vmax.f32 %v1435, 0.0
        %v1468 = vmax.f32 %v1436, 0.0
        %v1469 = vmax.f32 %v1437, 0.0
        %v1470 = vmax.f32 %v1438, 0.0
        %v1471 = vmax.f32 %v1439, 0.0
        %v1472 = vmax.f32 %v1440, 0.0
        %v1473 = vmax.f32 %v1441, 0.0
        %v1474 = vmax.f32 %v1442, 0.0
        %v1475 = vmax.f32 %v1443, 0.0
        %v1476 = vmax.f32 %v1444, 0.0
        %v1477 = vmax.f32 %v1445, 0.0
        %v1478 = vmax.f32 %v1446, 0.0
        %v1479 = vmax.f32 %v1447, 0.0
        %v1480 = vmax.f32 %v1448, 0.0
        %v1481 = vmax.f32 %v1449, 0.0
        %v1482 = vmax.f32 %v1450, 0.0
        %v1483 = vmax.f32 %v1451, 0.0
        %v1484 = vmax.f32 %v1452, 0.0
        %v1485 = vmax.f32 %v1453, 0.0
        %v1486 = vmax.f32 %v1454, 0.0
        %v1487 = vmax.f32 %v1455, 0.0
        %v1488 = vmax.f32 %v1456, 0.0
        %v1489 = vmax.f32 %v1457, 0.0
        %v1490 = vmax.f32 %v1458, 0.0
        %v1491 = vmax.f32 %v1459, 0.0
        %v1492 = vmax.f32 %v1460, 0.0
        %v1493 = vmax.f32 %v1461, 0.0
        %v1494 = vmax.f32 %v1462, 0.0
        %v1495 = vlaneseq
        %v1496 = vshrl.u32 %v1495, 7
        %v1497 = vadd.s32 %v1496, 8
        %v1498 = vadd.s32 %v1496, 16
        %v1499 = vadd.s32 %v1496, 24
        %vm1500 = vcmp.lt.s32.totalorder %v1496, 0
        %v1501 = vsub.s32 0, %v1496
        %v1502 = vsel %vm1500, %v1501, %v1496
        %v1503 = vshrl.u32 %v1502, 3
        %v1504 = vand.u32 %v1502, 7
        %v1505 = vsub.s32 0, %v1504
        %v1506 = vsel %vm1500, %v1505, %v1504
        %vm1507 = vcmp.lt.s32.totalorder %v1497, 0
        %v1508 = vsub.s32 0, %v1497
        %v1509 = vsel %vm1507, %v1508, %v1497
        %v1510 = vshrl.u32 %v1509, 3
        %v1511 = vand.u32 %v1509, 7
        %v1512 = vsub.s32 0, %v1511
        %v1513 = vsel %vm1507, %v1512, %v1511
        %vm1514 = vcmp.lt.s32.totalorder %v1498, 0
        %v1515 = vsub.s32 0, %v1498
        %v1516 = vsel %vm1514, %v1515, %v1498
        %v1517 = vshrl.u32 %v1516, 3
        %v1518 = vand.u32 %v1516, 7
        %v1519 = vsub.s32 0, %v1518
        %v1520 = vsel %vm1514, %v1519, %v1518
        %vm1521 = vcmp.lt.s32.totalorder %v1499, 0
        %v1522 = vsub.s32 0, %v1499
        %v1523 = vsel %vm1521, %v1522, %v1499
        %v1524 = vshrl.u32 %v1523, 3
        %v1525 = vand.u32 %v1523, 7
        %v1526 = vsub.s32 0, %v1525
        %v1527 = vsel %vm1521, %v1526, %v1525
        %vm1528 = vcmp.ne.s32.totalorder %v1506, 0
        %vm1529 = vcmp.ne.s32.totalorder %v1513, 0
        %vm1530 = vcmp.ne.s32.totalorder %v1520, 0
        %vm1531 = vcmp.ne.s32.totalorder %v1527, 0
        %vm1532 = vcmp.lt.s32.totalorder %v1506, 0
        %vm1533 = vcmp.lt.s32.totalorder %v1513, 0
        %vm1534 = vcmp.lt.s32.totalorder %v1520, 0
        %vm1535 = vcmp.lt.s32.totalorder %v1527, 0
        %vm1536 = vmand %vm1532, %vm1528
        %vm1537 = vmand %vm1533, %vm1529
        %vm1538 = vmand %vm1534, %vm1530
        %vm1539 = vmand %vm1535, %vm1531
        %v1540 = vadd.s32 %v1506, 8
        %v1541 = vadd.s32 %v1513, 8
        %v1542 = vadd.s32 %v1520, 8
        %v1543 = vadd.s32 %v1527, 8
        %v1544 = vsel %vm1536, %v1540, %v1506
        %v1545 = vsel %vm1537, %v1541, %v1513
        %v1546 = vsel %vm1538, %v1542, %v1520
        %v1547 = vsel %vm1539, %v1543, %v1527
        %vm1548 = vcmp.eq.s32.totalorder %v1544, 0
        %vm1549 = vcmp.eq.s32.totalorder %v1545, 0
        %vm1550 = vcmp.eq.s32.totalorder %v1546, 0
        %vm1551 = vcmp.eq.s32.totalorder %v1547, 0
        %v1552 = vrot.slane %v1463, 7
        %v1553 = vrot.slane %v1467, 7
        %v1554 = vrot.slane %v1471, 7
        %v1555 = vrot.slane %v1475, 7
        %v1556 = vrot.slane %v1479, 7
        %v1557 = vrot.slane %v1483, 7
        %v1558 = vrot.slane %v1487, 7
        %v1559 = vrot.slane %v1491, 7
        %v1560 = vrot.slane %v1464, 7
        %v1561 = vrot.slane %v1468, 7
        %v1562 = vrot.slane %v1472, 7
        %v1563 = vrot.slane %v1476, 7
        %v1564 = vrot.slane %v1480, 7
        %v1565 = vrot.slane %v1484, 7
        %v1566 = vrot.slane %v1488, 7
        %v1567 = vrot.slane %v1492, 7
        %v1568 = vrot.slane %v1465, 7
        %v1569 = vrot.slane %v1469, 7
        %v1570 = vrot.slane %v1473, 7
        %v1571 = vrot.slane %v1477, 7
        %v1572 = vrot.slane %v1481, 7
        %v1573 = vrot.slane %v1485, 7
        %v1574 = vrot.slane %v1489, 7
        %v1575 = vrot.slane %v1493, 7
        %v1576 = vrot.slane %v1466, 7
        %v1577 = vrot.slane %v1470, 7
        %v1578 = vrot.slane %v1474, 7
        %v1579 = vrot.slane %v1478, 7
        %v1580 = vrot.slane %v1482, 7
        %v1581 = vrot.slane %v1486, 7
        %v1582 = vrot.slane %v1490, 7
        %v1583 = vrot.slane %v1494, 7
        %vm1584 = vcmp.lt.s32.totalorder %v1496, 1
        %v1585 = vsel %vm1584, %v1568, %v1576
        %v1586 = vsel %vm1584, %v1569, %v1577
        %v1587 = vsel %vm1584, %v1570, %v1578
        %v1588 = vsel %vm1584, %v1571, %v1579
        %v1589 = vsel %vm1584, %v1572, %v1580
        %v1590 = vsel %vm1584, %v1573, %v1581
        %v1591 = vsel %vm1584, %v1574, %v1582
        %v1592 = vsel %vm1584, %v1575, %v1583
        %v1593 = vsel %vm1584, %v1560, %v1568
        %v1594 = vsel %vm1584, %v1561, %v1569
        %v1595 = vsel %vm1584, %v1562, %v1570
        %v1596 = vsel %vm1584, %v1563, %v1571
        %v1597 = vsel %vm1584, %v1564, %v1572
        %v1598 = vsel %vm1584, %v1565, %v1573
        %v1599 = vsel %vm1584, %v1566, %v1574
        %v1600 = vsel %vm1584, %v1567, %v1575
        %v1601 = vsel %vm1584, %v1552, %v1560
        %v1602 = vsel %vm1584, %v1553, %v1561
        %v1603 = vsel %vm1584, %v1554, %v1562
        %v1604 = vsel %vm1584, %v1555, %v1563
        %v1605 = vsel %vm1584, %v1556, %v1564
        %v1606 = vsel %vm1584, %v1557, %v1565
        %v1607 = vsel %vm1584, %v1558, %v1566
        %v1608 = vsel %vm1584, %v1559, %v1567
        %v1609 = vsel %vm1584, %v1576, %v1552
        %v1610 = vsel %vm1584, %v1577, %v1553
        %v1611 = vsel %vm1584, %v1578, %v1554
        %v1612 = vsel %vm1584, %v1579, %v1555
        %v1613 = vsel %vm1584, %v1580, %v1556
        %v1614 = vsel %vm1584, %v1581, %v1557
        %v1615 = vsel %vm1584, %v1582, %v1558
        %v1616 = vsel %vm1584, %v1583, %v1559
        %v1617 = vsel %vm1548, 0.0, %v1609
        %v1618 = vsel %vm1549, 0.0, %v1601
        %v1619 = vsel %vm1550, 0.0, %v1593
        %v1620 = vsel %vm1551, 0.0, %v1585
        %v1621 = vsel %vm1548, 0.0, %v1610
        %v1622 = vsel %vm1549, 0.0, %v1602
        %v1623 = vsel %vm1550, 0.0, %v1594
        %v1624 = vsel %vm1551, 0.0, %v1586
        %v1625 = vsel %vm1548, 0.0, %v1611
        %v1626 = vsel %vm1549, 0.0, %v1603
        %v1627 = vsel %vm1550, 0.0, %v1595
        %v1628 = vsel %vm1551, 0.0, %v1587
        %v1629 = vsel %vm1548, 0.0, %v1612
        %v1630 = vsel %vm1549, 0.0, %v1604
        %v1631 = vsel %vm1550, 0.0, %v1596
        %v1632 = vsel %vm1551, 0.0, %v1588
        %v1633 = vsel %vm1548, 0.0, %v1613
        %v1634 = vsel %vm1549, 0.0, %v1605
        %v1635 = vsel %vm1550, 0.0, %v1597
        %v1636 = vsel %vm1551, 0.0, %v1589
        %v1637 = vsel %vm1548, 0.0, %v1614
        %v1638 = vsel %vm1549, 0.0, %v1606
        %v1639 = vsel %vm1550, 0.0, %v1598
        %v1640 = vsel %vm1551, 0.0, %v1590
        %v1641 = vsel %vm1548, 0.0, %v1615
        %v1642 = vsel %vm1549, 0.0, %v1607
        %v1643 = vsel %vm1550, 0.0, %v1599
        %v1644 = vsel %vm1551, 0.0, %v1591
        %v1645 = vsel %vm1548, 0.0, %v1616
        %v1646 = vsel %vm1549, 0.0, %v1608
        %v1647 = vsel %vm1550, 0.0, %v1600
        %v1648 = vsel %vm1551, 0.0, %v1592
        %vm1649 = vcmp.eq.s32.totalorder %v1544, 7
        %vm1650 = vcmp.eq.s32.totalorder %v1545, 7
        %vm1651 = vcmp.eq.s32.totalorder %v1546, 7
        %vm1652 = vcmp.eq.s32.totalorder %v1547, 7
        %v1653 = vrot.slane %v1463, 1
        %v1654 = vrot.slane %v1467, 1
        %v1655 = vrot.slane %v1471, 1
        %v1656 = vrot.slane %v1475, 1
        %v1657 = vrot.slane %v1479, 1
        %v1658 = vrot.slane %v1483, 1
        %v1659 = vrot.slane %v1487, 1
        %v1660 = vrot.slane %v1491, 1
        %v1661 = vrot.slane %v1464, 1
        %v1662 = vrot.slane %v1468, 1
        %v1663 = vrot.slane %v1472, 1
        %v1664 = vrot.slane %v1476, 1
        %v1665 = vrot.slane %v1480, 1
        %v1666 = vrot.slane %v1484, 1
        %v1667 = vrot.slane %v1488, 1
        %v1668 = vrot.slane %v1492, 1
        %v1669 = vrot.slane %v1465, 1
        %v1670 = vrot.slane %v1469, 1
        %v1671 = vrot.slane %v1473, 1
        %v1672 = vrot.slane %v1477, 1
        %v1673 = vrot.slane %v1481, 1
        %v1674 = vrot.slane %v1485, 1
        %v1675 = vrot.slane %v1489, 1
        %v1676 = vrot.slane %v1493, 1
        %v1677 = vrot.slane %v1466, 1
        %v1678 = vrot.slane %v1470, 1
        %v1679 = vrot.slane %v1474, 1
        %v1680 = vrot.slane %v1478, 1
        %v1681 = vrot.slane %v1482, 1
        %v1682 = vrot.slane %v1486, 1
        %v1683 = vrot.slane %v1490, 1
        %v1684 = vrot.slane %v1494, 1
        %vm1685 = vcmp.lt.s32.totalorder %v1496, 7
        %v1686 = vsel %vm1685, %v1669, %v1677
        %v1687 = vsel %vm1685, %v1670, %v1678
        %v1688 = vsel %vm1685, %v1671, %v1679
        %v1689 = vsel %vm1685, %v1672, %v1680
        %v1690 = vsel %vm1685, %v1673, %v1681
        %v1691 = vsel %vm1685, %v1674, %v1682
        %v1692 = vsel %vm1685, %v1675, %v1683
        %v1693 = vsel %vm1685, %v1676, %v1684
        %v1694 = vsel %vm1685, %v1661, %v1669
        %v1695 = vsel %vm1685, %v1662, %v1670
        %v1696 = vsel %vm1685, %v1663, %v1671
        %v1697 = vsel %vm1685, %v1664, %v1672
        %v1698 = vsel %vm1685, %v1665, %v1673
        %v1699 = vsel %vm1685, %v1666, %v1674
        %v1700 = vsel %vm1685, %v1667, %v1675
        %v1701 = vsel %vm1685, %v1668, %v1676
        %v1702 = vsel %vm1685, %v1653, %v1661
        %v1703 = vsel %vm1685, %v1654, %v1662
        %v1704 = vsel %vm1685, %v1655, %v1663
        %v1705 = vsel %vm1685, %v1656, %v1664
        %v1706 = vsel %vm1685, %v1657, %v1665
        %v1707 = vsel %vm1685, %v1658, %v1666
        %v1708 = vsel %vm1685, %v1659, %v1667
        %v1709 = vsel %vm1685, %v1660, %v1668
        %v1710 = vsel %vm1685, %v1677, %v1653
        %v1711 = vsel %vm1685, %v1678, %v1654
        %v1712 = vsel %vm1685, %v1679, %v1655
        %v1713 = vsel %vm1685, %v1680, %v1656
        %v1714 = vsel %vm1685, %v1681, %v1657
        %v1715 = vsel %vm1685, %v1682, %v1658
        %v1716 = vsel %vm1685, %v1683, %v1659
        %v1717 = vsel %vm1685, %v1684, %v1660
        %v1718 = vsel %vm1649, 0.0, %v1702
        %v1719 = vsel %vm1650, 0.0, %v1694
        %v1720 = vsel %vm1651, 0.0, %v1686
        %v1721 = vsel %vm1652, 0.0, %v1710
        %v1722 = vsel %vm1649, 0.0, %v1703
        %v1723 = vsel %vm1650, 0.0, %v1695
        %v1724 = vsel %vm1651, 0.0, %v1687
        %v1725 = vsel %vm1652, 0.0, %v1711
        %v1726 = vsel %vm1649, 0.0, %v1704
        %v1727 = vsel %vm1650, 0.0, %v1696
        %v1728 = vsel %vm1651, 0.0, %v1688
        %v1729 = vsel %vm1652, 0.0, %v1712
        %v1730 = vsel %vm1649, 0.0, %v1705
        %v1731 = vsel %vm1650, 0.0, %v1697
        %v1732 = vsel %vm1651, 0.0, %v1689
        %v1733 = vsel %vm1652, 0.0, %v1713
        %v1734 = vsel %vm1649, 0.0, %v1706
        %v1735 = vsel %vm1650, 0.0, %v1698
        %v1736 = vsel %vm1651, 0.0, %v1690
        %v1737 = vsel %vm1652, 0.0, %v1714
        %v1738 = vsel %vm1649, 0.0, %v1707
        %v1739 = vsel %vm1650, 0.0, %v1699
        %v1740 = vsel %vm1651, 0.0, %v1691
        %v1741 = vsel %vm1652, 0.0, %v1715
        %v1742 = vsel %vm1649, 0.0, %v1708
        %v1743 = vsel %vm1650, 0.0, %v1700
        %v1744 = vsel %vm1651, 0.0, %v1692
        %v1745 = vsel %vm1652, 0.0, %v1716
        %v1746 = vsel %vm1649, 0.0, %v1709
        %v1747 = vsel %vm1650, 0.0, %v1701
        %v1748 = vsel %vm1651, 0.0, %v1693
        %v1749 = vsel %vm1652, 0.0, %v1717
        %1782 = vrot.lane.b32.xlu0 %v1463, 32
        %v1783 = vpop.permute.xlu0 %1782
        %1784 = vrot.lane.b32.xlu0 %v1464, 32
        %v1785 = vpop.permute.xlu0 %1784
        %1786 = vrot.lane.b32.xlu0 %v1465, 32
        %v1787 = vpop.permute.xlu0 %1786
        %1788 = vrot.lane.b32.xlu0 %v1466, 32
        %v1789 = vpop.permute.xlu0 %1788
        %1790 = vrot.lane.b32.xlu0 %v1467, 32
        %v1791 = vpop.permute.xlu0 %1790
        %1792 = vrot.lane.b32.xlu0 %v1468, 32
        %v1793 = vpop.permute.xlu0 %1792
        %1794 = vrot.lane.b32.xlu0 %v1469, 32
        %v1795 = vpop.permute.xlu0 %1794
        %1796 = vrot.lane.b32.xlu0 %v1470, 32
        %v1797 = vpop.permute.xlu0 %1796
        %1798 = vrot.lane.b32.xlu0 %v1471, 32
        %v1799 = vpop.permute.xlu0 %1798
        %1800 = vrot.lane.b32.xlu0 %v1472, 32
        %v1801 = vpop.permute.xlu0 %1800
        %1802 = vrot.lane.b32.xlu0 %v1473, 32
        %v1803 = vpop.permute.xlu0 %1802
        %1804 = vrot.lane.b32.xlu0 %v1474, 32
        %v1805 = vpop.permute.xlu0 %1804
        %1806 = vrot.lane.b32.xlu0 %v1475, 32
        %v1807 = vpop.permute.xlu0 %1806
        %1808 = vrot.lane.b32.xlu0 %v1476, 32
        %v1809 = vpop.permute.xlu0 %1808
        %1810 = vrot.lane.b32.xlu0 %v1477, 32
        %v1811 = vpop.permute.xlu0 %1810
        %1812 = vrot.lane.b32.xlu0 %v1478, 32
        %v1813 = vpop.permute.xlu0 %1812
        %1814 = vrot.lane.b32.xlu0 %v1479, 32
        %v1815 = vpop.permute.xlu0 %1814
        %1816 = vrot.lane.b32.xlu0 %v1480, 32
        %v1817 = vpop.permute.xlu0 %1816
        %1818 = vrot.lane.b32.xlu0 %v1481, 32
        %v1819 = vpop.permute.xlu0 %1818
        %1820 = vrot.lane.b32.xlu0 %v1482, 32
        %v1821 = vpop.permute.xlu0 %1820
        %1822 = vrot.lane.b32.xlu0 %v1483, 32
        %v1823 = vpop.permute.xlu0 %1822
        %1824 = vrot.lane.b32.xlu0 %v1484, 32
        %v1825 = vpop.permute.xlu0 %1824
        %1826 = vrot.lane.b32.xlu0 %v1485, 32
        %v1827 = vpop.permute.xlu0 %1826
        %1828 = vrot.lane.b32.xlu0 %v1486, 32
        %v1829 = vpop.permute.xlu0 %1828
        %1830 = vrot.lane.b32.xlu0 %v1487, 32
        %v1831 = vpop.permute.xlu0 %1830
        %1832 = vrot.lane.b32.xlu0 %v1488, 32
        %v1833 = vpop.permute.xlu0 %1832
        %1834 = vrot.lane.b32.xlu0 %v1489, 32
        %v1835 = vpop.permute.xlu0 %1834
        %1836 = vrot.lane.b32.xlu0 %v1490, 32
        %v1837 = vpop.permute.xlu0 %1836
        %1838 = vrot.lane.b32.xlu0 %v1491, 32
        %v1839 = vpop.permute.xlu0 %1838
        %1840 = vrot.lane.b32.xlu0 %v1492, 32
        %v1841 = vpop.permute.xlu0 %1840
        %1842 = vrot.lane.b32.xlu0 %v1493, 32
        %v1843 = vpop.permute.xlu0 %1842
        %1844 = vrot.lane.b32.xlu0 %v1494, 32
        %v1845 = vpop.permute.xlu0 %1844
        %1910 = vrot.lane.b32.xlu0 %v1718, 64
        %v1911 = vpop.permute.xlu0 %1910
        %1912 = vrot.lane.b32.xlu0 %v1719, 64
        %v1913 = vpop.permute.xlu0 %1912
        %1914 = vrot.lane.b32.xlu0 %v1720, 64
        %v1915 = vpop.permute.xlu0 %1914
        %1916 = vrot.lane.b32.xlu0 %v1721, 64
        %v1917 = vpop.permute.xlu0 %1916
        %1918 = vrot.lane.b32.xlu0 %v1722, 64
        %v1919 = vpop.permute.xlu0 %1918
        %1920 = vrot.lane.b32.xlu0 %v1723, 64
        %v1921 = vpop.permute.xlu0 %1920
        %1922 = vrot.lane.b32.xlu0 %v1724, 64
        %v1923 = vpop.permute.xlu0 %1922
        %1924 = vrot.lane.b32.xlu0 %v1725, 64
        %v1925 = vpop.permute.xlu0 %1924
        %1926 = vrot.lane.b32.xlu0 %v1726, 64
        %v1927 = vpop.permute.xlu0 %1926
        %1928 = vrot.lane.b32.xlu0 %v1727, 64
        %v1929 = vpop.permute.xlu0 %1928
        %1930 = vrot.lane.b32.xlu0 %v1728, 64
        %v1931 = vpop.permute.xlu0 %1930
        %1932 = vrot.lane.b32.xlu0 %v1729, 64
        %v1933 = vpop.permute.xlu0 %1932
        %1934 = vrot.lane.b32.xlu0 %v1730, 64
        %v1935 = vpop.permute.xlu0 %1934
        %1936 = vrot.lane.b32.xlu0 %v1731, 64
        %v1937 = vpop.permute.xlu0 %1936
        %1938 = vrot.lane.b32.xlu0 %v1732, 64
        %v1939 = vpop.permute.xlu0 %1938
        %1940 = vrot.lane.b32.xlu0 %v1733, 64
        %v1941 = vpop.permute.xlu0 %1940
        %1942 = vrot.lane.b32.xlu0 %v1734, 64
        %v1943 = vpop.permute.xlu0 %1942
        %1944 = vrot.lane.b32.xlu0 %v1735, 64
        %v1945 = vpop.permute.xlu0 %1944
        %1946 = vrot.lane.b32.xlu0 %v1736, 64
        %v1947 = vpop.permute.xlu0 %1946
        %1948 = vrot.lane.b32.xlu0 %v1737, 64
        %v1949 = vpop.permute.xlu0 %1948
        %1950 = vrot.lane.b32.xlu0 %v1738, 64
        %v1951 = vpop.permute.xlu0 %1950
        %1952 = vrot.lane.b32.xlu0 %v1739, 64
        %v1953 = vpop.permute.xlu0 %1952
        %1954 = vrot.lane.b32.xlu0 %v1740, 64
        %v1955 = vpop.permute.xlu0 %1954
        %1956 = vrot.lane.b32.xlu0 %v1741, 64
        %v1957 = vpop.permute.xlu0 %1956
        %1958 = vrot.lane.b32.xlu0 %v1742, 64
        %v1959 = vpop.permute.xlu0 %1958
        %1960 = vrot.lane.b32.xlu0 %v1743, 64
        %v1961 = vpop.permute.xlu0 %1960
        %1962 = vrot.lane.b32.xlu0 %v1744, 64
        %v1963 = vpop.permute.xlu0 %1962
        %1964 = vrot.lane.b32.xlu0 %v1745, 64
        %v1965 = vpop.permute.xlu0 %1964
        %1966 = vrot.lane.b32.xlu0 %v1746, 64
        %v1967 = vpop.permute.xlu0 %1966
        %1968 = vrot.lane.b32.xlu0 %v1747, 64
        %v1969 = vpop.permute.xlu0 %1968
        %1970 = vrot.lane.b32.xlu0 %v1748, 64
        %v1971 = vpop.permute.xlu0 %1970
        %1972 = vrot.lane.b32.xlu0 %v1749, 64
        %v1973 = vpop.permute.xlu0 %1972
        %vm2006 = vcmask 261120
        %v2007 = vsel %vm2006, %v1617, %v1783
        %v2008 = vsel %vm2006, %v1618, %v1785
        %v2009 = vsel %vm2006, %v1619, %v1787
        %v2010 = vsel %vm2006, %v1620, %v1789
        %v2011 = vsel %vm2006, %v1621, %v1791
        %v2012 = vsel %vm2006, %v1622, %v1793
        %v2013 = vsel %vm2006, %v1623, %v1795
        %v2014 = vsel %vm2006, %v1624, %v1797
        %v2015 = vsel %vm2006, %v1625, %v1799
        %v2016 = vsel %vm2006, %v1626, %v1801
        %v2017 = vsel %vm2006, %v1627, %v1803
        %v2018 = vsel %vm2006, %v1628, %v1805
        %v2019 = vsel %vm2006, %v1629, %v1807
        %v2020 = vsel %vm2006, %v1630, %v1809
        %v2021 = vsel %vm2006, %v1631, %v1811
        %v2022 = vsel %vm2006, %v1632, %v1813
        %v2023 = vsel %vm2006, %v1633, %v1815
        %v2024 = vsel %vm2006, %v1634, %v1817
        %v2025 = vsel %vm2006, %v1635, %v1819
        %v2026 = vsel %vm2006, %v1636, %v1821
        %v2027 = vsel %vm2006, %v1637, %v1823
        %v2028 = vsel %vm2006, %v1638, %v1825
        %v2029 = vsel %vm2006, %v1639, %v1827
        %v2030 = vsel %vm2006, %v1640, %v1829
        %v2031 = vsel %vm2006, %v1641, %v1831
        %v2032 = vsel %vm2006, %v1642, %v1833
        %v2033 = vsel %vm2006, %v1643, %v1835
        %v2034 = vsel %vm2006, %v1644, %v1837
        %v2035 = vsel %vm2006, %v1645, %v1839
        %v2036 = vsel %vm2006, %v1646, %v1841
        %v2037 = vsel %vm2006, %v1647, %v1843
        %v2038 = vsel %vm2006, %v1648, %v1845
        %v2039 = vsel %vm702, %v2007, %v1911
        %v2040 = vsel %vm702, %v2008, %v1913
        %v2041 = vsel %vm702, %v2009, %v1915
        %v2042 = vsel %vm702, %v2010, %v1917
        %v2043 = vsel %vm702, %v2011, %v1919
        %v2044 = vsel %vm702, %v2012, %v1921
        %v2045 = vsel %vm702, %v2013, %v1923
        %v2046 = vsel %vm702, %v2014, %v1925
        %v2047 = vsel %vm702, %v2015, %v1927
        %v2048 = vsel %vm702, %v2016, %v1929
        %v2049 = vsel %vm702, %v2017, %v1931
        %v2050 = vsel %vm702, %v2018, %v1933
        %v2051 = vsel %vm702, %v2019, %v1935
        %v2052 = vsel %vm702, %v2020, %v1937
        %v2053 = vsel %vm702, %v2021, %v1939
        %v2054 = vsel %vm702, %v2022, %v1941
        %v2055 = vsel %vm702, %v2023, %v1943
        %v2056 = vsel %vm702, %v2024, %v1945
        %v2057 = vsel %vm702, %v2025, %v1947
        %v2058 = vsel %vm702, %v2026, %v1949
        %v2059 = vsel %vm702, %v2027, %v1951
        %v2060 = vsel %vm702, %v2028, %v1953
        %v2061 = vsel %vm702, %v2029, %v1955
        %v2062 = vsel %vm702, %v2030, %v1957
        %v2063 = vsel %vm702, %v2031, %v1959
        %v2064 = vsel %vm702, %v2032, %v1961
        %v2065 = vsel %vm702, %v2033, %v1963
        %v2066 = vsel %vm702, %v2034, %v1965
        %v2067 = vsel %vm702, %v2035, %v1967
        %v2068 = vsel %vm702, %v2036, %v1969
        %v2069 = vsel %vm702, %v2037, %v1971
        %v2070 = vsel %vm702, %v2038, %v1973
        %v2071 = vpack.c.bf16 %v2040, %v2039
        %v2072 = vpack.c.bf16 %v2042, %v2041
        %v2073 = vpack.c.bf16 %v2044, %v2043
        %v2074 = vpack.c.bf16 %v2046, %v2045
        %v2075 = vpack.c.bf16 %v2048, %v2047
        %v2076 = vpack.c.bf16 %v2050, %v2049
        %v2077 = vpack.c.bf16 %v2052, %v2051
        %v2078 = vpack.c.bf16 %v2054, %v2053
        %v2079 = vpack.c.bf16 %v2056, %v2055
        %v2080 = vpack.c.bf16 %v2058, %v2057
        %v2081 = vpack.c.bf16 %v2060, %v2059
        %v2082 = vpack.c.bf16 %v2062, %v2061
        %v2083 = vpack.c.bf16 %v2064, %v2063
        %v2084 = vpack.c.bf16 %v2066, %v2065
        %v2085 = vpack.c.bf16 %v2068, %v2067
        %v2086 = vpack.c.bf16 %v2070, %v2069
        %v2099 = vunpack.c.l.b16 %v505
        %v2100 = vunpack.c.l.b16 %v506
        %v2101 = vunpack.c.l.b16 %v507
        %v2102 = vunpack.c.l.b16 %v508
        %v2103 = vunpack.c.l.b16 %v509
        %v2104 = vunpack.c.l.b16 %v510
        %v2105 = vunpack.c.l.b16 %v511
        %v2106 = vunpack.c.l.b16 %v512
        %v2107 = vunpack.c.l.b16 %v513
        %v2108 = vunpack.c.l.b16 %v514
        %v2109 = vunpack.c.l.b16 %v515
        %v2110 = vunpack.c.l.b16 %v516
        %v2111 = vpack.c.b16 %v2100, %v2099
        %v2112 = vpack.c.b16 %v2102, %v2101
        %v2113 = vpack.c.b16 %v2104, %v2103
        %v2114 = vpack.c.b16 %v2106, %v2105
        %v2115 = vpack.c.b16 %v2108, %v2107
        %v2116 = vpack.c.b16 %v2110, %v2109
        %vm2123 = vcmask 785408
        %v2125 = vsel %vm2123, %v2071, 0
        %v2128 = vsel %vm2123, %v2072, 0
        %v2131 = vsel %vm2123, %v2073, 0
        %v2134 = vsel %vm2123, %v2074, 0
        %v2137 = vsel %vm2123, %v2075, 0
        %v2140 = vsel %vm2123, %v2076, 0
        %v2143 = vsel %vm2123, %v2077, 0
        %v2146 = vsel %vm2123, %v2078, 0
        %v2149 = vsel %vm2123, %v2079, 0
        %v2152 = vsel %vm2123, %v2080, 0
        %v2155 = vsel %vm2123, %v2081, 0
        %v2158 = vsel %vm2123, %v2082, 0
        %v2161 = vsel %vm2123, %v2083, 0
        %v2164 = vsel %vm2123, %v2084, 0
        %v2167 = vsel %vm2123, %v2085, 0
        %v2170 = vsel %vm2123, %v2086, 0
        %2172 = vmatprep.subr.bf16.mxu0 0
        %2173 = vmatpush1.bf16.msra.mxu0 %v2111
        %2174 = vmatprep.subr.bf16.mxu0 0
        %2175 = vmatpush1.bf16.msra.mxu0 %v2112
        %2176 = vmatprep.subr.bf16.mxu0 0
        %2177 = vmatpush1.bf16.msra.mxu0 %v2113
        %2178 = vmatprep.subr.bf16.mxu0 0
        %2179 = vmatpush1.bf16.msra.mxu0 %v2114
        %2180 = vmatprep.subr.bf16.mxu0 0
        %2181 = vmatpush1.bf16.msra.mxu0 %v2115
        %2182 = vmatprep.subr.bf16.mxu0 0
        %2183 = vmatpush1.bf16.msra.mxu0 %v2116
        %2184 = vmatprep.subr.bf16.mxu0 0
        %2185 = vmatpush1.bf16.msra.mxu0 0
        %2186 = vmatprep.subr.bf16.mxu0 0
        %2187 = vmatpush1.bf16.msra.mxu0 0
        %2188 = vmatprep.subr.bf16.mxu0 0
        %2189 = vmatpush1.bf16.msra.mxu0 0
        %2190 = vmatprep.subr.bf16.mxu0 0
        %2191 = vmatpush1.bf16.msra.mxu0 0
        %2192 = vmatprep.subr.bf16.mxu0 0
        %2193 = vmatpush1.bf16.msra.mxu0 0
        %2194 = vmatprep.subr.bf16.mxu0 0
        %2195 = vmatpush1.bf16.msra.mxu0 0
        %2196 = vmatprep.subr.bf16.mxu0 0
        %2197 = vmatpush1.bf16.msra.mxu0 0
        %2198 = vmatprep.subr.bf16.mxu0 0
        %2199 = vmatpush1.bf16.msra.mxu0 0
        %2200 = vmatprep.subr.bf16.mxu0 0
        %2201 = vmatpush1.bf16.msra.mxu0 0
        %2202 = vmatprep.subr.bf16.mxu0 0
        %2203 = vmatpush1.bf16.msra.mxu0 0
        %2204 = vmatprep.mubr.bf16.mxu0 0
        %2205 = vmatmul.mubr.bf16.gmra.mrb[0].mxu0 %v2125
        %v2206 = vpop.f32.mrb[0].mxu0
        %v2207 = vadd.f32 0.0, %v2206
        %v2208 = vpop.f32.mrb[0].mxu0
        %v2209 = vpop.f32.mrb[0].mxu0
        %v2210 = vadd.f32 0.0, %v2209
        %v2211 = vpop.f32.mrb[0].mxu0
        %2212 = vmatprep.mubr.bf16.mxu0 0
        %2213 = vmatmul.mubr.bf16.gmra.mrb[0].mxu0 %v2128
        %v2214 = vpop.f32.mrb[0].mxu0
        %v2215 = vadd.f32 0.0, %v2214
        %v2216 = vpop.f32.mrb[0].mxu0
        %v2217 = vpop.f32.mrb[0].mxu0
        %v2218 = vadd.f32 0.0, %v2217
        %v2219 = vpop.f32.mrb[0].mxu0
        %2220 = vmatprep.mubr.bf16.mxu0 0
        %2221 = vmatmul.mubr.bf16.gmra.mrb[0].mxu0 %v2131
        %v2222 = vpop.f32.mrb[0].mxu0
        %v2223 = vadd.f32 0.0, %v2222
        %v2224 = vpop.f32.mrb[0].mxu0
        %v2225 = vpop.f32.mrb[0].mxu0
        %v2226 = vadd.f32 0.0, %v2225
        %v2227 = vpop.f32.mrb[0].mxu0
        %2228 = vmatprep.mubr.bf16.mxu0 0
        %2229 = vmatmul.mubr.bf16.gmra.mrb[0].mxu0 %v2134
        %v2230 = vpop.f32.mrb[0].mxu0
        %v2231 = vadd.f32 0.0, %v2230
        %v2232 = vpop.f32.mrb[0].mxu0
        %v2233 = vpop.f32.mrb[0].mxu0
        %v2234 = vadd.f32 0.0, %v2233
        %v2235 = vpop.f32.mrb[0].mxu0
        %2236 = vmatprep.mubr.bf16.mxu0 0
        %2237 = vmatmul.mubr.bf16.gmra.mrb[0].mxu0 %v2137
        %v2238 = vpop.f32.mrb[0].mxu0
        %v2239 = vadd.f32 0.0, %v2238
        %v2240 = vpop.f32.mrb[0].mxu0
        %v2241 = vpop.f32.mrb[0].mxu0
        %v2242 = vadd.f32 0.0, %v2241
        %v2243 = vpop.f32.mrb[0].mxu0
        %2244 = vmatprep.mubr.bf16.mxu0 0
        %2245 = vmatmul.mubr.bf16.gmra.mrb[0].mxu0 %v2140
        %v2246 = vpop.f32.mrb[0].mxu0
        %v2247 = vadd.f32 0.0, %v2246
        %v2248 = vpop.f32.mrb[0].mxu0
        %v2249 = vpop.f32.mrb[0].mxu0
        %v2250 = vadd.f32 0.0, %v2249
        %v2251 = vpop.f32.mrb[0].mxu0
        %2252 = vmatprep.mubr.bf16.mxu0 0
        %2253 = vmatmul.mubr.bf16.gmra.mrb[0].mxu0 %v2143
        %v2254 = vpop.f32.mrb[0].mxu0
        %v2255 = vadd.f32 0.0, %v2254
        %v2256 = vpop.f32.mrb[0].mxu0
        %v2257 = vpop.f32.mrb[0].mxu0
        %v2258 = vadd.f32 0.0, %v2257
        %v2259 = vpop.f32.mrb[0].mxu0
        %2260 = vmatprep.mubr.bf16.mxu0 0
        %2261 = vmatmul.mubr.bf16.gmra.mrb[0].mxu0 %v2146
        %v2262 = vpop.f32.mrb[0].mxu0
        %v2263 = vadd.f32 0.0, %v2262
        %v2264 = vpop.f32.mrb[0].mxu0
        %v2265 = vpop.f32.mrb[0].mxu0
        %v2266 = vadd.f32 0.0, %v2265
        %v2267 = vpop.f32.mrb[0].mxu0
        %2268 = vmatprep.mubr.bf16.mxu0 0
        %2269 = vmatmul.mubr.bf16.gmra.mrb[0].mxu0 %v2149
        %v2270 = vpop.f32.mrb[0].mxu0
        %v2271 = vadd.f32 0.0, %v2270
        %v2272 = vpop.f32.mrb[0].mxu0
        %v2273 = vpop.f32.mrb[0].mxu0
        %v2274 = vadd.f32 0.0, %v2273
        %v2275 = vpop.f32.mrb[0].mxu0
        %2276 = vmatprep.mubr.bf16.mxu0 0
        %2277 = vmatmul.mubr.bf16.gmra.mrb[0].mxu0 %v2152
        %v2278 = vpop.f32.mrb[0].mxu0
        %v2279 = vadd.f32 0.0, %v2278
        %v2280 = vpop.f32.mrb[0].mxu0
        %v2281 = vpop.f32.mrb[0].mxu0
        %v2282 = vadd.f32 0.0, %v2281
        %v2283 = vpop.f32.mrb[0].mxu0
        %2284 = vmatprep.mubr.bf16.mxu0 0
        %2285 = vmatmul.mubr.bf16.gmra.mrb[0].mxu0 %v2155
        %v2286 = vpop.f32.mrb[0].mxu0
        %v2287 = vadd.f32 0.0, %v2286
        %v2288 = vpop.f32.mrb[0].mxu0
        %v2289 = vpop.f32.mrb[0].mxu0
        %v2290 = vadd.f32 0.0, %v2289
        %v2291 = vpop.f32.mrb[0].mxu0
        %2292 = vmatprep.mubr.bf16.mxu0 0
        %2293 = vmatmul.mubr.bf16.gmra.mrb[0].mxu0 %v2158
        %v2294 = vpop.f32.mrb[0].mxu0
        %v2295 = vadd.f32 0.0, %v2294
        %v2296 = vpop.f32.mrb[0].mxu0
        %v2297 = vpop.f32.mrb[0].mxu0
        %v2298 = vadd.f32 0.0, %v2297
        %v2299 = vpop.f32.mrb[0].mxu0
        %2300 = vmatprep.mubr.bf16.mxu0 0
        %2301 = vmatmul.mubr.bf16.gmra.mrb[0].mxu0 %v2161
        %v2302 = vpop.f32.mrb[0].mxu0
        %v2303 = vadd.f32 0.0, %v2302
        %v2304 = vpop.f32.mrb[0].mxu0
        %v2305 = vpop.f32.mrb[0].mxu0
        %v2306 = vadd.f32 0.0, %v2305
        %v2307 = vpop.f32.mrb[0].mxu0
        %2308 = vmatprep.mubr.bf16.mxu0 0
        %2309 = vmatmul.mubr.bf16.gmra.mrb[0].mxu0 %v2164
        %v2310 = vpop.f32.mrb[0].mxu0
        %v2311 = vadd.f32 0.0, %v2310
        %v2312 = vpop.f32.mrb[0].mxu0
        %v2313 = vpop.f32.mrb[0].mxu0
        %v2314 = vadd.f32 0.0, %v2313
        %v2315 = vpop.f32.mrb[0].mxu0
        %2316 = vmatprep.mubr.bf16.mxu0 0
        %2317 = vmatmul.mubr.bf16.gmra.mrb[0].mxu0 %v2167
        %v2318 = vpop.f32.mrb[0].mxu0
        %v2319 = vadd.f32 0.0, %v2318
        %v2320 = vpop.f32.mrb[0].mxu0
        %v2321 = vpop.f32.mrb[0].mxu0
        %v2322 = vadd.f32 0.0, %v2321
        %v2323 = vpop.f32.mrb[0].mxu0
        %2324 = vmatprep.mubr.bf16.mxu0 0
        %2325 = vmatmul.mubr.bf16.gmra.mrb[0].mxu0 %v2170
        %v2326 = vpop.f32.mrb[0].mxu0
        %v2327 = vadd.f32 0.0, %v2326
        %v2328 = vpop.f32.mrb[0].mxu0
        %v2329 = vpop.f32.mrb[0].mxu0
        %v2330 = vadd.f32 0.0, %v2329
        %v2331 = vpop.f32.mrb[0].mxu0
        %2332 = vdwg.mxu0
        %v2334 = vlaneseq
        %v2335 = vshrl.u32 %v2334, 7
        %v2336 = vsub.s32 0, %v2335
        %v2337 = vrot.slane %v517, %v2336
        %v2339 = vadd.f32 %v2207, %v2337
        %v2340 = vadd.f32 %v2210, %v2337
        %v2341 = vadd.f32 %v2215, %v2337
        %v2342 = vadd.f32 %v2218, %v2337
        %v2343 = vadd.f32 %v2223, %v2337
        %v2344 = vadd.f32 %v2226, %v2337
        %v2345 = vadd.f32 %v2231, %v2337
        %v2346 = vadd.f32 %v2234, %v2337
        %v2347 = vadd.f32 %v2239, %v2337
        %v2348 = vadd.f32 %v2242, %v2337
        %v2349 = vadd.f32 %v2247, %v2337
        %v2350 = vadd.f32 %v2250, %v2337
        %v2351 = vadd.f32 %v2255, %v2337
        %v2352 = vadd.f32 %v2258, %v2337
        %v2353 = vadd.f32 %v2263, %v2337
        %v2354 = vadd.f32 %v2266, %v2337
        %v2355 = vadd.f32 %v2271, %v2337
        %v2356 = vadd.f32 %v2274, %v2337
        %v2357 = vadd.f32 %v2279, %v2337
        %v2358 = vadd.f32 %v2282, %v2337
        %v2359 = vadd.f32 %v2287, %v2337
        %v2360 = vadd.f32 %v2290, %v2337
        %v2361 = vadd.f32 %v2295, %v2337
        %v2362 = vadd.f32 %v2298, %v2337
        %v2363 = vadd.f32 %v2303, %v2337
        %v2364 = vadd.f32 %v2306, %v2337
        %v2365 = vadd.f32 %v2311, %v2337
        %v2366 = vadd.f32 %v2314, %v2337
        %v2367 = vadd.f32 %v2319, %v2337
        %v2368 = vadd.f32 %v2322, %v2337
        %v2369 = vadd.f32 %v2327, %v2337
        %v2370 = vadd.f32 %v2330, %v2337
        %v2371 = vmax.f32 %v2339, 0.0
        %v2372 = vmax.f32 %v2340, 0.0
        %v2373 = vmax.f32 %v2341, 0.0
        %v2374 = vmax.f32 %v2342, 0.0
        %v2375 = vmax.f32 %v2343, 0.0
        %v2376 = vmax.f32 %v2344, 0.0
        %v2377 = vmax.f32 %v2345, 0.0
        %v2378 = vmax.f32 %v2346, 0.0
        %v2379 = vmax.f32 %v2347, 0.0
        %v2380 = vmax.f32 %v2348, 0.0
        %v2381 = vmax.f32 %v2349, 0.0
        %v2382 = vmax.f32 %v2350, 0.0
        %v2383 = vmax.f32 %v2351, 0.0
        %v2384 = vmax.f32 %v2352, 0.0
        %v2385 = vmax.f32 %v2353, 0.0
        %v2386 = vmax.f32 %v2354, 0.0
        %v2387 = vmax.f32 %v2355, 0.0
        %v2388 = vmax.f32 %v2356, 0.0
        %v2389 = vmax.f32 %v2357, 0.0
        %v2390 = vmax.f32 %v2358, 0.0
        %v2391 = vmax.f32 %v2359, 0.0
        %v2392 = vmax.f32 %v2360, 0.0
        %v2393 = vmax.f32 %v2361, 0.0
        %v2394 = vmax.f32 %v2362, 0.0
        %v2395 = vmax.f32 %v2363, 0.0
        %v2396 = vmax.f32 %v2364, 0.0
        %v2397 = vmax.f32 %v2365, 0.0
        %v2398 = vmax.f32 %v2366, 0.0
        %v2399 = vmax.f32 %v2367, 0.0
        %v2400 = vmax.f32 %v2368, 0.0
        %v2401 = vmax.f32 %v2369, 0.0
        %v2402 = vmax.f32 %v2370, 0.0
        %v2403 = vmax.f32 %v2371, %v2387
        %v2404 = vmax.f32 %v2372, %v2388
        %v2405 = vmax.f32 %v2373, %v2389
        %v2406 = vmax.f32 %v2374, %v2390
        %v2407 = vmax.f32 %v2375, %v2391
        %v2408 = vmax.f32 %v2376, %v2392
        %v2409 = vmax.f32 %v2377, %v2393
        %v2410 = vmax.f32 %v2378, %v2394
        %v2411 = vmax.f32 %v2379, %v2395
        %v2412 = vmax.f32 %v2380, %v2396
        %v2413 = vmax.f32 %v2381, %v2397
        %v2414 = vmax.f32 %v2382, %v2398
        %v2415 = vmax.f32 %v2383, %v2399
        %v2416 = vmax.f32 %v2384, %v2400
        %v2417 = vmax.f32 %v2385, %v2401
        %v2418 = vmax.f32 %v2386, %v2402
        %v2419 = vmax.f32 %v2403, 0.0
        %v2420 = vmax.f32 %v2404, 0.0
        %v2421 = vmax.f32 %v2405, 0.0
        %v2422 = vmax.f32 %v2406, 0.0
        %v2423 = vmax.f32 %v2407, %v2387
        %v2424 = vmax.f32 %v2408, %v2388
        %v2425 = vmax.f32 %v2409, %v2389
        %v2426 = vmax.f32 %v2410, %v2390
        %v2427 = vmax.f32 %v2411, %v2391
        %v2428 = vmax.f32 %v2412, %v2392
        %v2429 = vmax.f32 %v2413, %v2393
        %v2430 = vmax.f32 %v2414, %v2394
        %v2431 = vmax.f32 %v2415, %v2395
        %v2432 = vmax.f32 %v2416, %v2396
        %v2433 = vmax.f32 %v2417, %v2397
        %v2434 = vmax.f32 %v2418, %v2398
        %v2435 = vpack.c.bf16 %v1464, %v1463
        %v2436 = vpack.c.bf16 %v1466, %v1465
        %v2437 = vpack.c.bf16 %v1468, %v1467
        %v2438 = vpack.c.bf16 %v1470, %v1469
        %v2439 = vpack.c.bf16 %v1472, %v1471
        %v2440 = vpack.c.bf16 %v1474, %v1473
        %v2441 = vpack.c.bf16 %v1476, %v1475
        %v2442 = vpack.c.bf16 %v1478, %v1477
        %v2443 = vpack.c.bf16 %v1480, %v1479
        %v2444 = vpack.c.bf16 %v1482, %v1481
        %v2445 = vpack.c.bf16 %v1484, %v1483
        %v2446 = vpack.c.bf16 %v1486, %v1485
        %v2447 = vpack.c.bf16 %v1488, %v1487
        %v2448 = vpack.c.bf16 %v1490, %v1489
        %v2449 = vpack.c.bf16 %v1492, %v1491
        %v2450 = vpack.c.bf16 %v1494, %v1493
        %2459 = vrot.lane.b32.xlu0 %v2435, 32
        %v2460 = vpop.permute.xlu0 %2459
        %2461 = vrot.lane.b32.xlu0 %v2436, 32
        %v2462 = vpop.permute.xlu0 %2461
        %2463 = vrot.lane.b32.xlu0 %v2437, 32
        %v2464 = vpop.permute.xlu0 %2463
        %2465 = vrot.lane.b32.xlu0 %v2438, 32
        %v2466 = vpop.permute.xlu0 %2465
        %2467 = vrot.lane.b32.xlu0 %v2439, 32
        %v2468 = vpop.permute.xlu0 %2467
        %2469 = vrot.lane.b32.xlu0 %v2440, 32
        %v2470 = vpop.permute.xlu0 %2469
        %2471 = vrot.lane.b32.xlu0 %v2441, 32
        %v2472 = vpop.permute.xlu0 %2471
        %2473 = vrot.lane.b32.xlu0 %v2442, 32
        %v2474 = vpop.permute.xlu0 %2473
        %2483 = vrot.lane.b32.xlu0 %v2443, 64
        %v2484 = vpop.permute.xlu0 %2483
        %2485 = vrot.lane.b32.xlu0 %v2444, 64
        %v2486 = vpop.permute.xlu0 %2485
        %2487 = vrot.lane.b32.xlu0 %v2445, 64
        %v2488 = vpop.permute.xlu0 %2487
        %2489 = vrot.lane.b32.xlu0 %v2446, 64
        %v2490 = vpop.permute.xlu0 %2489
        %2491 = vrot.lane.b32.xlu0 %v2447, 64
        %v2492 = vpop.permute.xlu0 %2491
        %2493 = vrot.lane.b32.xlu0 %v2448, 64
        %v2494 = vpop.permute.xlu0 %2493
        %2495 = vrot.lane.b32.xlu0 %v2449, 64
        %v2496 = vpop.permute.xlu0 %2495
        %2497 = vrot.lane.b32.xlu0 %v2450, 64
        %v2498 = vpop.permute.xlu0 %2497
        %v2501 = vsel %vm2006, 0, %v2460
        %v2503 = vsel %vm2006, 0, %v2462
        %v2506 = vsel %vm2006, %v2443, %v2464
        %v2509 = vsel %vm2006, %v2444, %v2466
        %v2512 = vsel %vm2006, %v2445, %v2468
        %v2515 = vsel %vm2006, %v2446, %v2470
        %v2518 = vsel %vm2006, %v2447, %v2472
        %v2521 = vsel %vm2006, %v2448, %v2474
        %v2523 = vsel %vm702, %v2501, %v2484
        %v2525 = vsel %vm702, %v2503, %v2486
        %v2527 = vsel %vm702, %v2506, %v2488
        %v2529 = vsel %vm702, %v2509, %v2490
        %v2531 = vsel %vm702, %v2512, %v2492
        %v2533 = vsel %vm702, %v2515, %v2494
        %v2535 = vsel %vm702, %v2518, %v2496
        %v2537 = vsel %vm702, %v2521, %v2498
        %v2550 = vunpack.c.l.b16 %v518
        %v2551 = vunpack.c.l.b16 %v519
        %v2552 = vunpack.c.l.b16 %v520
        %v2553 = vunpack.c.l.b16 %v521
        %v2554 = vunpack.c.l.b16 %v522
        %v2555 = vunpack.c.l.b16 %v523
        %v2556 = vunpack.c.l.b16 %v524
        %v2557 = vunpack.c.l.b16 %v525
        %v2558 = vunpack.c.l.b16 %v526
        %v2559 = vunpack.c.l.b16 %v527
        %v2560 = vunpack.c.l.b16 %v528
        %v2561 = vunpack.c.l.b16 %v529
        %v2562 = vpack.c.b16 %v2551, %v2550
        %v2563 = vpack.c.b16 %v2553, %v2552
        %v2564 = vpack.c.b16 %v2555, %v2554
        %v2565 = vpack.c.b16 %v2557, %v2556
        %v2566 = vpack.c.b16 %v2559, %v2558
        %v2567 = vpack.c.b16 %v2561, %v2560
        %v2574 = vsel %vm2123, %v2523, 0
        %v2576 = vsel %vm2123, %v2525, 0
        %v2578 = vsel %vm2123, %v2527, 0
        %v2580 = vsel %vm2123, %v2529, 0
        %v2582 = vsel %vm2123, %v2531, 0
        %v2584 = vsel %vm2123, %v2533, 0
        %v2586 = vsel %vm2123, %v2535, 0
        %v2588 = vsel %vm2123, %v2537, 0
        %2590 = vmatprep.subr.bf16.mxu0 0
        %2591 = vmatpush1.bf16.msra.mxu0 %v2562
        %2592 = vmatprep.subr.bf16.mxu0 0
        %2593 = vmatpush1.bf16.msra.mxu0 %v2563
        %2594 = vmatprep.subr.bf16.mxu0 0
        %2595 = vmatpush1.bf16.msra.mxu0 %v2564
        %2596 = vmatprep.subr.bf16.mxu0 0
        %2597 = vmatpush1.bf16.msra.mxu0 %v2565
        %2598 = vmatprep.subr.bf16.mxu0 0
        %2599 = vmatpush1.bf16.msra.mxu0 %v2566
        %2600 = vmatprep.subr.bf16.mxu0 0
        %2601 = vmatpush1.bf16.msra.mxu0 %v2567
        %2602 = vmatprep.subr.bf16.mxu0 0
        %2603 = vmatpush1.bf16.msra.mxu0 0
        %2604 = vmatprep.subr.bf16.mxu0 0
        %2605 = vmatpush1.bf16.msra.mxu0 0
        %2606 = vmatprep.subr.bf16.mxu0 0
        %2607 = vmatpush1.bf16.msra.mxu0 0
        %2608 = vmatprep.subr.bf16.mxu0 0
        %2609 = vmatpush1.bf16.msra.mxu0 0
        %2610 = vmatprep.subr.bf16.mxu0 0
        %2611 = vmatpush1.bf16.msra.mxu0 0
        %2612 = vmatprep.subr.bf16.mxu0 0
        %2613 = vmatpush1.bf16.msra.mxu0 0
        %2614 = vmatprep.subr.bf16.mxu0 0
        %2615 = vmatpush1.bf16.msra.mxu0 0
        %2616 = vmatprep.subr.bf16.mxu0 0
        %2617 = vmatpush1.bf16.msra.mxu0 0
        %2618 = vmatprep.subr.bf16.mxu0 0
        %2619 = vmatpush1.bf16.msra.mxu0 0
        %2620 = vmatprep.subr.bf16.mxu0 0
        %2621 = vmatpush1.bf16.msra.mxu0 0
        %2622 = vmatprep.mubr.bf16.mxu0 0
        %2623 = vmatmul.mubr.bf16.gmra.mrb[0].mxu0 %v2574
        %v2624 = vpop.f32.mrb[0].mxu0
        %v2625 = vadd.f32 0.0, %v2624
        %v2626 = vpop.f32.mrb[0].mxu0
        %v2627 = vpop.f32.mrb[0].mxu0
        %v2628 = vadd.f32 0.0, %v2627
        %v2629 = vpop.f32.mrb[0].mxu0
        %2630 = vmatprep.mubr.bf16.mxu0 0
        %2631 = vmatmul.mubr.bf16.gmra.mrb[0].mxu0 %v2576
        %v2632 = vpop.f32.mrb[0].mxu0
        %v2633 = vadd.f32 0.0, %v2632
        %v2634 = vpop.f32.mrb[0].mxu0
        %v2635 = vpop.f32.mrb[0].mxu0
        %v2636 = vadd.f32 0.0, %v2635
        %v2637 = vpop.f32.mrb[0].mxu0
        %2638 = vmatprep.mubr.bf16.mxu0 0
        %2639 = vmatmul.mubr.bf16.gmra.mrb[0].mxu0 %v2578
        %v2640 = vpop.f32.mrb[0].mxu0
        %v2641 = vadd.f32 0.0, %v2640
        %v2642 = vpop.f32.mrb[0].mxu0
        %v2643 = vpop.f32.mrb[0].mxu0
        %v2644 = vadd.f32 0.0, %v2643
        %v2645 = vpop.f32.mrb[0].mxu0
        %2646 = vmatprep.mubr.bf16.mxu0 0
        %2647 = vmatmul.mubr.bf16.gmra.mrb[0].mxu0 %v2580
        %v2648 = vpop.f32.mrb[0].mxu0
        %v2649 = vadd.f32 0.0, %v2648
        %v2650 = vpop.f32.mrb[0].mxu0
        %v2651 = vpop.f32.mrb[0].mxu0
        %v2652 = vadd.f32 0.0, %v2651
        %v2653 = vpop.f32.mrb[0].mxu0
        %2654 = vmatprep.mubr.bf16.mxu0 0
        %2655 = vmatmul.mubr.bf16.gmra.mrb[0].mxu0 %v2582
        %v2656 = vpop.f32.mrb[0].mxu0
        %v2657 = vadd.f32 0.0, %v2656
        %v2658 = vpop.f32.mrb[0].mxu0
        %v2659 = vpop.f32.mrb[0].mxu0
        %v2660 = vadd.f32 0.0, %v2659
        %v2661 = vpop.f32.mrb[0].mxu0
        %2662 = vmatprep.mubr.bf16.mxu0 0
        %2663 = vmatmul.mubr.bf16.gmra.mrb[0].mxu0 %v2584
        %v2664 = vpop.f32.mrb[0].mxu0
        %v2665 = vadd.f32 0.0, %v2664
        %v2666 = vpop.f32.mrb[0].mxu0
        %v2667 = vpop.f32.mrb[0].mxu0
        %v2668 = vadd.f32 0.0, %v2667
        %v2669 = vpop.f32.mrb[0].mxu0
        %2670 = vmatprep.mubr.bf16.mxu0 0
        %2671 = vmatmul.mubr.bf16.gmra.mrb[0].mxu0 %v2586
        %v2672 = vpop.f32.mrb[0].mxu0
        %v2673 = vadd.f32 0.0, %v2672
        %v2674 = vpop.f32.mrb[0].mxu0
        %v2675 = vpop.f32.mrb[0].mxu0
        %v2676 = vadd.f32 0.0, %v2675
        %v2677 = vpop.f32.mrb[0].mxu0
        %2678 = vmatprep.mubr.bf16.mxu0 0
        %2679 = vmatmul.mubr.bf16.gmra.mrb[0].mxu0 %v2588
        %v2680 = vpop.f32.mrb[0].mxu0
        %v2681 = vadd.f32 0.0, %v2680
        %v2682 = vpop.f32.mrb[0].mxu0
        %v2683 = vpop.f32.mrb[0].mxu0
        %v2684 = vadd.f32 0.0, %v2683
        %v2685 = vpop.f32.mrb[0].mxu0
        %2686 = vdwg.mxu0
        %v2688 = vlaneseq
        %v2689 = vshrl.u32 %v2688, 7
        %v2690 = vsub.s32 0, %v2689
        %v2691 = vrot.slane %v530, %v2690
        %v2693 = vadd.f32 %v2625, %v2691
        %v2694 = vadd.f32 %v2628, %v2691
        %v2695 = vadd.f32 %v2633, %v2691
        %v2696 = vadd.f32 %v2636, %v2691
        %v2697 = vadd.f32 %v2641, %v2691
        %v2698 = vadd.f32 %v2644, %v2691
        %v2699 = vadd.f32 %v2649, %v2691
        %v2700 = vadd.f32 %v2652, %v2691
        %v2701 = vadd.f32 %v2657, %v2691
        %v2702 = vadd.f32 %v2660, %v2691
        %v2703 = vadd.f32 %v2665, %v2691
        %v2704 = vadd.f32 %v2668, %v2691
        %v2705 = vadd.f32 %v2673, %v2691
        %v2706 = vadd.f32 %v2676, %v2691
        %v2707 = vadd.f32 %v2681, %v2691
        %v2708 = vadd.f32 %v2684, %v2691
        %v2709 = vmax.f32 %v2693, 0.0
        %v2710 = vmax.f32 %v2694, 0.0
        %v2711 = vmax.f32 %v2695, 0.0
        %v2712 = vmax.f32 %v2696, 0.0
        %v2713 = vmax.f32 %v2697, 0.0
        %v2714 = vmax.f32 %v2698, 0.0
        %v2715 = vmax.f32 %v2699, 0.0
        %v2716 = vmax.f32 %v2700, 0.0
        %v2717 = vmax.f32 %v2701, 0.0
        %v2718 = vmax.f32 %v2702, 0.0
        %v2719 = vmax.f32 %v2703, 0.0
        %v2720 = vmax.f32 %v2704, 0.0
        %v2721 = vmax.f32 %v2705, 0.0
        %v2722 = vmax.f32 %v2706, 0.0
        %v2723 = vmax.f32 %v2707, 0.0
        %v2724 = vmax.f32 %v2708, 0.0
        %v2725 = vadd.f32 %v2419, %v2709
        %v2726 = vadd.f32 %v2420, %v2710
        %v2727 = vadd.f32 %v2421, %v2711
        %v2728 = vadd.f32 %v2422, %v2712
        %v2729 = vadd.f32 %v2423, %v2713
        %v2730 = vadd.f32 %v2424, %v2714
        %v2731 = vadd.f32 %v2425, %v2715
        %v2732 = vadd.f32 %v2426, %v2716
        %v2733 = vadd.f32 %v2427, %v2717
        %v2734 = vadd.f32 %v2428, %v2718
        %v2735 = vadd.f32 %v2429, %v2719
        %v2736 = vadd.f32 %v2430, %v2720
        %v2737 = vadd.f32 %v2431, %v2721
        %v2738 = vadd.f32 %v2432, %v2722
        %v2739 = vadd.f32 %v2433, %v2723
        %v2740 = vadd.f32 %v2434, %v2724
        %v2741 = vadd.f32 %v2725, %v998
        %v2742 = vadd.f32 %v2726, %v999
        %v2743 = vadd.f32 %v2727, %v1000
        %v2744 = vadd.f32 %v2728, %v1001
        %v2745 = vadd.f32 %v2729, %v1002
        %v2746 = vadd.f32 %v2730, %v1003
        %v2747 = vadd.f32 %v2731, %v1004
        %v2748 = vadd.f32 %v2732, %v1005
        %v2749 = vadd.f32 %v2733, %v1006
        %v2750 = vadd.f32 %v2734, %v1007
        %v2751 = vadd.f32 %v2735, %v1008
        %v2752 = vadd.f32 %v2736, %v1009
        %v2753 = vadd.f32 %v2737, %v1010
        %v2754 = vadd.f32 %v2738, %v1011
        %v2755 = vadd.f32 %v2739, %v1012
        %v2756 = vadd.f32 %v2740, %v1013
        %2757 = vst [vmem:[%s483] sm:$0xff] %v2741
        %2758 = vst [vmem:[%s483 + $0x8] sm:$0xff] %v2742
        %2759 = vst [vmem:[%s483 + $0x10] sm:$0xff] %v2743
        %2760 = vst [vmem:[%s483 + $0x18] sm:$0xff] %v2744
        %2761 = vst [vmem:[%s483 + $0x20] sm:$0xff] %v2745
        %2762 = vst [vmem:[%s483 + $0x28] sm:$0xff] %v2746
        %2763 = vst [vmem:[%s483 + $0x30] sm:$0xff] %v2747
        %2764 = vst [vmem:[%s483 + $0x38] sm:$0xff] %v2748
        %2765 = vst [vmem:[%s483 + $0x40] sm:$0xff] %v2749
        %2766 = vst [vmem:[%s483 + $0x48] sm:$0xff] %v2750
        %2767 = vst [vmem:[%s483 + $0x50] sm:$0xff] %v2751
        %2768 = vst [vmem:[%s483 + $0x58] sm:$0xff] %v2752
        %2769 = vst [vmem:[%s483 + $0x60] sm:$0xff] %v2753
        %2770 = vst [vmem:[%s483 + $0x68] sm:$0xff] %v2754
        %2771 = vst [vmem:[%s483 + $0x70] sm:$0xff] %v2755
        %2772 = vst [vmem:[%s483 + $0x78] sm:$0xff] %v2756
        %s2773 = sand.u32 %s232, 1
        %s2774 = scalar_lea.sflag [#allocation4], %s2773
        %s2775 = sand.u32 %s232, 1
        %s2776 = smul.addr %s2775, 128
        %s2777 = scalar_lea.vmem [#allocation17], %s2776
        // Predicated region
        $region93: #{block_a_forward.1} parent=55 // pred_check
          %p2778 = pneg %p242
        $region94: #{block_a_forward.1} parent=55 // pred_check_branch
          %2780 = sbr.rel (%p2778) target = $region96
        $region95: #{block_a_forward.1} parent=55 // pred_region
          #allocation21 [shape = 'u32[6]{0}', space=smem, size = 0x18, scoped, tag = 'DMA stride descriptor']
          %s2781 = smul.u32 4, %s30
          %s2783 = ssub.s32 2048, 2048
          %2784 = vsyncadd %s2774, %s2783
          %s2785 = smul.addr %s2781, 128
          %s2786 = scalar_lea.hbm %s9, %s2785
          %s2788 = sshll.u32 1, 14
          %s2789 = sxor.u32 4294967295, %s2788
          %s2792 = sshll.u32 7, 18
          %s2793 = sxor.u32 4294967295, %s2792
          %s2794 = sand.u32 0, %s2793
          %s2796 = sor.u32 %s2794, 0
          %s2798 = sshll.u32 3, 24
          %s2799 = sxor.u32 4294967295, %s2798
          %s2800 = sand.u32 %s2796, %s2799
          %s2802 = sor.u32 %s2800, 0
          %s2803 = sshll.u32 %s2777, 4
          %s2804 = int_to_ptr.vmem [resolvable:$true] %s2803
          %2810 = sst [smem:[#allocation21]] 512
          %s2811 = scalar_lea.smem [#allocation21], 1
          %2812 = sst [smem:[%s2811]] 1024
          %s2813 = scalar_lea.smem [#allocation21], 2
          %2814 = sst [smem:[%s2813]] 4
          %s2815 = scalar_lea.smem [#allocation21], 3
          %2816 = sst [smem:[%s2815]] 128
          %s2817 = scalar_lea.smem [#allocation21], 4
          %2818 = sst [smem:[%s2817]] 128
          %s2819 = scalar_lea.smem [#allocation21], 5
          %2820 = sst [smem:[%s2819]] 8
          %2822 = dma.general %s2804, 2048, %s2786, %s2774, [#allocation20], [#allocation21], %s2802, 0
        $region96: #{block_a_forward.1} parent=55 // pred_fallthru
          _
      $region56: #{block_a_forward.1} parent=5 // pred_fallthru
        _
      %p2823 = scmp.le.s32.totalorder 2, %s25
      // Predicated region
      $region97: #{block_a_forward.1} parent=5 // pred_check
        %p2824 = pneg %p2823
      $region98: #{block_a_forward.1} parent=5 // pred_check_branch
        %2826 = sbr.rel (%p2824) target = $region100
      $region99: #{block_a_forward.1} parent=5 // pred_region
        %s2827 = ssub.s32 %s25, 2
        // Predicated region
        $region101: #{block_a_forward.1} parent=99 // pred_check
          %p2828 = pneg %p248
        $region102: #{block_a_forward.1} parent=99 // pred_check_branch
          %2830 = sbr.rel (%p2828) target = $region104
        $region103: #{block_a_forward.1} parent=99 // pred_region
          %s2831 = sand.u32 %s233, 1
          %s2832 = scalar_lea.sflag [#allocation4], %s2831
          %s2833 = sand.u32 %s233, 1
          %s2834 = smul.addr %s2833, 128
          %s2835 = scalar_lea.vmem [#allocation17], %s2834
          %2836 = dma.done %s2832, 2048
        $region104: #{block_a_forward.1} parent=99 // pred_fallthru
          _
      $region100: #{block_a_forward.1} parent=5 // pred_fallthru
        _
    $region6: #{block_a_forward.1} parent=1 // loop_footer
      %s29 = sadd.s32 1, %s25
    $region7: #{block_a_forward.1} parent=1 // loop_footer_branch
      %24 = sbr.rel target = $region3
    $region8: #{block_a_forward.1} parent=1 // loop_exit
      _
    %2837 = vsyncpa [#allocation3], 1
    %s2838 = scalar_lea.sflag [#allocation3], 1
    %2839 = vsyncpa %s2838, 1
    %2840 = vsyncpa [#allocation6], 1
    %2841 = vsyncpa [#allocation9], 1
    %2842 = vsyncpa [#allocation12], 1
    %2843 = vsyncpa [#allocation15], 1
    %2844 = vsyncpa [#allocation4], 1
    %s2845 = scalar_lea.sflag [#allocation4], 1
    %2846 = vsyncpa %s2845, 1

</llo_original>
